<compile_context>
chip_gen: v7x
topology: tpu7x:2x2x1
jax: 0.10.0
libtpu: 0.0.40
codegen_flags: <defaults>
</compile_context>

<pallas_src>
import jax
import jax.numpy as jnp
from jax import lax
from jax.experimental import pallas as pl
from jax.experimental.pallas import tpu as pltpu


def _round_up(x, m):
    return ((x + m - 1) // m) * m


def _pad2(x, rows, cols, dtype):
    x = x.astype(dtype)
    return jnp.pad(x, ((0, rows - x.shape[0]), (0, cols - x.shape[1])))


def clip_logits_kernel(scale_ref, img_ref, wimg_ref, txt_ref, wtxt_ref,
                       out_ref, acc_ref):
    """Grid = (image-batch tiles, K-reduction tiles)."""
    k = pl.program_id(1)

    @pl.when(k == 0)
    def _():
        acc_ref[...] = jnp.zeros_like(acc_ref)

    # Partial image projection for this K slab: bf16 operands, f32 accumulate.
    acc_ref[...] += jnp.dot(img_ref[...], wimg_ref[...],
                            preferred_element_type=jnp.float32)

    # Finalize once per image tile (normalization + similarity), P3 pattern.
    @pl.when(k == pl.num_programs(1) - 1)
    def _():
        # L2-normalize image embeddings in f32.
        img_emb = acc_ref[...]
        img_n = img_emb * lax.rsqrt(
            jnp.sum(img_emb * img_emb, axis=-1, keepdims=True) + 1e-12)

        # Text projection + L2 norm; fold the logit scale into the text side so
        # no broadcast multiply is needed on the (Bi, Bt) logits tile.
        txt_emb = jnp.dot(txt_ref[...], wtxt_ref[...],
                          preferred_element_type=jnp.float32)
        scale = scale_ref[0, 0]
        txt_ns = txt_emb * (scale * lax.rsqrt(
            jnp.sum(txt_emb * txt_emb, axis=-1, keepdims=True) + 1e-12))

        # image_logits tile = img_n @ (scale * txt_n).T   (contract feature dim)
        out_ref[...] = lax.dot_general(
            img_n.astype(jnp.bfloat16), txt_ns.astype(jnp.bfloat16),
            (((1,), (1,)), ((), ())),
            preferred_element_type=jnp.float32)


def biomedclip_forward(images_nchw, text_ids, params, *, tbi=128, tk=512):
    """Glue (flatten / embed / pool / pad) in JAX, hot path in one Pallas kernel."""
    w_img = params["w_img"]              # (C*H*W, D)
    w_txt = params["w_txt"]              # (E, D)
    tok_emb = params["tok_emb"]          # (V, E)
    logit_scale = params["logit_scale"]  # (1, 1) f32

    B_i = images_nchw.shape[0]
    B_t = text_ids.shape[0]
    K, D = w_img.shape
    E = w_txt.shape[0]

    # --- Glue in plain JAX ---------------------------------------------------
    # TODO(synk): token-embedding gather + mean pool stay in XLA (no clean tiled
    # Pallas gather at these sizes).
    img_flat = images_nchw.reshape(B_i, -1).astype(jnp.float32)
    txt_pooled = jnp.mean(jnp.take(tok_emb, text_ids, axis=0), axis=1)

    # --- Pad to MXU/lane-friendly shapes (zero padding is numerically inert) --
    B_i_p = _round_up(B_i, tbi)
    B_t_p = _round_up(B_t, 128)          # lane-dense logits last dim
    K_p = _round_up(K, tk)
    D_p = _round_up(D, 128)
    E_p = _round_up(E, 128)

    img_p = _pad2(img_flat, B_i_p, K_p, jnp.bfloat16)
    wimg_p = _pad2(w_img, K_p, D_p, jnp.bfloat16)
    txt_p = _pad2(txt_pooled, B_t_p, E_p, jnp.bfloat16)
    wtxt_p = _pad2(w_txt, E_p, D_p, jnp.bfloat16)

    grid = (B_i_p // tbi, K_p // tk)

    img_logits_p = pl.pallas_call(
        clip_logits_kernel,
        out_shape=jax.ShapeDtypeStruct((B_i_p, B_t_p), jnp.float32),
        grid_spec=pltpu.PrefetchScalarGridSpec(
            num_scalar_prefetch=0,
            grid=grid,
            in_specs=[
                pl.BlockSpec((1, 1), lambda i, k: (0, 0),
                             memory_space=pltpu.MemorySpace.SMEM),  # logit_scale
                pl.BlockSpec((tbi, tk), lambda i, k: (i, k)),       # img_flat tile
                pl.BlockSpec((tk, D_p), lambda i, k: (k, 0)),       # w_img tile
                pl.BlockSpec((B_t_p, E_p), lambda i, k: (0, 0)),    # txt_pooled
                pl.BlockSpec((E_p, D_p), lambda i, k: (0, 0)),      # w_txt
            ],
            out_specs=pl.BlockSpec((tbi, B_t_p), lambda i, k: (i, 0)),
            scratch_shapes=[pltpu.VMEM((tbi, D_p), jnp.float32)],
        ),
        compiler_params=pltpu.CompilerParams(
            dimension_semantics=("parallel", "arbitrary"),
            vmem_limit_bytes=32 * 1024 * 1024,
        ),
    )(logit_scale, img_p, wimg_p, txt_p, wtxt_p)

    img_logits = img_logits_p[:B_i, :B_t]
    # text_logits is exactly the transpose of image_logits; no second matmul.
    txt_logits = img_logits.T
    # TODO(synk): for very large text batches, add a B_t grid axis and tile the
    # similarity matmul instead of keeping the full padded B_t per output block.
    return img_logits, txt_logits


def reference_forward(images_nchw, text_ids, params):
    """Pure-JAX f32 reference for the same computation."""
    img_flat = images_nchw.reshape(images_nchw.shape[0], -1).astype(jnp.float32)
    txt_pooled = jnp.mean(jnp.take(params["tok_emb"], text_ids, axis=0), axis=1)
    img_emb = img_flat @ params["w_img"]
    txt_emb = txt_pooled @ params["w_txt"]
    img_n = img_emb / jnp.sqrt(
        jnp.sum(img_emb * img_emb, axis=-1, keepdims=True) + 1e-12)
    txt_n = txt_emb / jnp.sqrt(
        jnp.sum(txt_emb * txt_emb, axis=-1, keepdims=True) + 1e-12)
    s = params["logit_scale"][0, 0]
    return s * img_n @ txt_n.T, s * txt_n @ img_n.T


if __name__ == "__main__":
    # Small shapes consistent with the module's forward semantics.
    B_IMG, C, H, W = 2, 4, 16, 16     # images: NCHW
    B_TXT, L = 4, 8                   # texts: token ids
    VOCAB, E, D = 32, 32, 64          # vocab, text embed dim, joint proj dim

    key = jax.random.PRNGKey(0)
    k_img, k_txt, k_wimg, k_wtxt, k_tok = jax.random.split(key, 5)

    images = jax.random.normal(k_img, (B_IMG, C, H, W), dtype=jnp.float32)
    texts = jax.random.randint(k_txt, (B_TXT, L), 0, VOCAB, dtype=jnp.int32)

    params = {
        "w_img": jax.random.normal(k_wimg, (C * H * W, D), jnp.float32) * 0.02,
        "w_txt": jax.random.normal(k_wtxt, (E, D), jnp.float32) * 0.02,
        "tok_emb": jax.random.normal(k_tok, (VOCAB, E), jnp.float32) * 0.02,
        # CLIP-style learned temperature, exp(log(1/0.07)).
        "logit_scale": jnp.full((1, 1), 1.0 / 0.07, dtype=jnp.float32),
    }

    img_logits, txt_logits = jax.jit(biomedclip_forward)(images, texts, params)
    jax.block_until_ready((img_logits, txt_logits))

    ref_img, ref_txt = reference_forward(images, texts, params)
    assert img_logits.shape == (B_IMG, B_TXT)
    assert txt_logits.shape == (B_TXT, B_IMG)
    # bf16 MXU operands vs f32 reference -> slightly loosened tolerance.
    assert jnp.allclose(img_logits, ref_img, rtol=2e-2, atol=3e-2), (
        float(jnp.max(jnp.abs(img_logits - ref_img))))
    assert jnp.allclose(txt_logits, ref_txt, rtol=2e-2, atol=3e-2), (
        float(jnp.max(jnp.abs(txt_logits - ref_txt))))

    print("KERNEL_OK")
</pallas_src>

<mosaic_0001>
module attributes {stable_mosaic.version = 11 : i64} {
  func.func @clip_logits_kernel(%arg0: i32, %arg1: i32, %arg2: memref<1x1xf32, #tpu.memory_space<smem>>, %arg3: memref<128x512xbf16, #tpu.memory_space<vmem>>, %arg4: memref<512x128xbf16, #tpu.memory_space<vmem>>, %arg5: memref<128x128xbf16, #tpu.memory_space<vmem>>, %arg6: memref<128x128xbf16, #tpu.memory_space<vmem>>, %arg7: memref<128x128xf32, #tpu.memory_space<vmem>>, %arg8: memref<128x128xf32, #tpu.memory_space<vmem>>) attributes {dimension_semantics = [#tpu.dimension_semantics<parallel>, #tpu.dimension_semantics<arbitrary>], iteration_bounds = array<i64: 1, 2>, scalar_prefetch = 0 : i64, scratch_operands = 1 : i64, tpu.core_type = #tpu.core_type<tc>, window_params = [{transform_indices = @transform_0, window_bounds = array<i64: 1, 1>}, {transform_indices = @transform_1, window_bounds = array<i64: 128, 512>}, {transform_indices = @transform_2, window_bounds = array<i64: 512, 128>}, {pipeline_mode = #tpu.pipeline_mode<synchronous>, transform_indices = @transform_3, window_bounds = array<i64: 128, 128>}, {pipeline_mode = #tpu.pipeline_mode<synchronous>, transform_indices = @transform_4, window_bounds = array<i64: 128, 128>}, {transform_indices = @transform_5, window_bounds = array<i64: 128, 128>}]} {
    %c0_i32 = arith.constant 0 : i32
    %0 = arith.cmpi eq, %arg1, %c0_i32 : i32
    %1 = arith.extui %0 : i1 to i32
    %c0_i32_0 = arith.constant 0 : i32
    %2 = arith.cmpi ne, %1, %c0_i32_0 : i32
    scf.if %2 {
      %cst_9 = arith.constant 0.000000e+00 : f32
      %12 = vector.broadcast %cst_9 : f32 to vector<128x128xf32>
      %c0_10 = arith.constant 0 : index
      %c0_11 = arith.constant 0 : index
      %13 = vector.load %arg8[%c0_10, %c0_11] : memref<128x128xf32, #tpu.memory_space<vmem>>, vector<128x128xf32>
      tpu.vector_store %arg8[%c0_10, %c0_11], %12 {strides = array<i32>} : memref<128x128xf32, #tpu.memory_space<vmem>>, vector<128x128xf32>,
    } else {
    }
    %c0 = arith.constant 0 : index
    %c0_1 = arith.constant 0 : index
    %3 = vector.load %arg8[%c0, %c0_1] : memref<128x128xf32, #tpu.memory_space<vmem>>, vector<128x128xf32>
    %c0_2 = arith.constant 0 : index
    %c0_3 = arith.constant 0 : index
    %4 = vector.load %arg3[%c0_2, %c0_3] : memref<128x512xbf16, #tpu.memory_space<vmem>>, vector<128x512xbf16>
    %c0_4 = arith.constant 0 : index
    %c0_5 = arith.constant 0 : index
    %5 = vector.load %arg4[%c0_4, %c0_5] : memref<512x128xbf16, #tpu.memory_space<vmem>>, vector<512x128xbf16>
    %cst = arith.constant dense<0.000000e+00> : vector<128x128xf32>
    %6 = tpu.matmul %4, %5, %cst {dimension_numbers = #tpu.dot_dimension_numbers<[1], [0], [0], [1], [0, 0, 1, 1], [], []>} : vector<128x512xbf16>, vector<512x128xbf16>, vector<128x128xf32> -> vector<128x128xf32>
    %7 = arith.addf %3, %6 : vector<128x128xf32>
    %c0_6 = arith.constant 0 : index
    %c0_7 = arith.constant 0 : index
    %8 = vector.load %arg8[%c0_6, %c0_7] : memref<128x128xf32, #tpu.memory_space<vmem>>, vector<128x128xf32>
    tpu.vector_store %arg8[%c0_6, %c0_7], %7 {strides = array<i32>} : memref<128x128xf32, #tpu.memory_space<vmem>>, vector<128x128xf32>,
    %c1_i32 = arith.constant 1 : i32
    %9 = arith.cmpi eq, %arg1, %c1_i32 : i32
    %10 = arith.extui %9 : i1 to i32
    %c0_i32_8 = arith.constant 0 : i32
    %11 = arith.cmpi ne, %10, %c0_i32_8 : i32
    scf.if %11 {
      %c0_9 = arith.constant 0 : index
      %c0_10 = arith.constant 0 : index
      %12 = vector.load %arg8[%c0_9, %c0_10] : memref<128x128xf32, #tpu.memory_space<vmem>>, vector<128x128xf32>
      %13 = arith.mulf %12, %12 : vector<128x128xf32>
      %cst_11 = arith.constant dense<0.000000e+00> : vector<128xf32>
      %14 = vector.multi_reduction <add>, %13, %cst_11 [1] : vector<128x128xf32> to vector<128xf32>
      %15 = vector.shape_cast %14 : vector<128xf32> to vector<128x1xf32>
      %cst_12 = arith.constant 9.99999996E-13 : f32
      %16 = vector.broadcast %cst_12 : f32 to vector<128x1xf32>
      %17 = arith.addf %15, %16 : vector<128x1xf32>
      %18 = math.rsqrt %17 : vector<128x1xf32>
      %19 = vector.broadcast %18 : vector<128x1xf32> to vector<128x128xf32>
      %20 = arith.mulf %12, %19 : vector<128x128xf32>
      %c0_13 = arith.constant 0 : index
      %c0_14 = arith.constant 0 : index
      %21 = vector.load %arg5[%c0_13, %c0_14] : memref<128x128xbf16, #tpu.memory_space<vmem>>, vector<128x128xbf16>
      %c0_15 = arith.constant 0 : index
      %c0_16 = arith.constant 0 : index
      %22 = vector.load %arg6[%c0_15, %c0_16] : memref<128x128xbf16, #tpu.memory_space<vmem>>, vector<128x128xbf16>
      %cst_17 = arith.constant dense<0.000000e+00> : vector<128x128xf32>
      %23 = tpu.matmul %21, %22, %cst_17 {dimension_numbers = #tpu.dot_dimension_numbers<[1], [0], [0], [1], [0, 0, 1, 1], [], []>} : vector<128x128xbf16>, vector<128x128xbf16>, vector<128x128xf32> -> vector<128x128xf32>
      %c0_18 = arith.constant 0 : index
      %c0_19 = arith.constant 0 : index
      %24 = memref.load %arg2[%c0_18, %c0_19] : memref<1x1xf32, #tpu.memory_space<smem>>
      %25 = arith.mulf %23, %23 : vector<128x128xf32>
      %cst_20 = arith.constant dense<0.000000e+00> : vector<128xf32>
      %26 = vector.multi_reduction <add>, %25, %cst_20 [1] : vector<128x128xf32> to vector<128xf32>
      %27 = vector.shape_cast %26 : vector<128xf32> to vector<128x1xf32>
      %cst_21 = arith.constant 9.99999996E-13 : f32
      %28 = vector.broadcast %cst_21 : f32 to vector<128x1xf32>
      %29 = arith.addf %27, %28 : vector<128x1xf32>
      %30 = math.rsqrt %29 : vector<128x1xf32>
      %31 = vector.broadcast %24 : f32 to vector<128x1xf32>
      %32 = arith.mulf %31, %30 : vector<128x1xf32>
      %33 = vector.broadcast %32 : vector<128x1xf32> to vector<128x128xf32>
      %34 = arith.mulf %23, %33 : vector<128x128xf32>
      %35 = arith.truncf %20 : vector<128x128xf32> to vector<128x128xbf16>
      %36 = arith.truncf %34 : vector<128x128xf32> to vector<128x128xbf16>
      %cst_22 = arith.constant dense<0.000000e+00> : vector<128x128xf32>
      %37 = tpu.matmul %35, %36, %cst_22 {dimension_numbers = #tpu.dot_dimension_numbers<[1], [1], [0], [0], [0, 0, 1, 0], [], []>} : vector<128x128xbf16>, vector<128x128xbf16>, vector<128x128xf32> -> vector<128x128xf32>
      %c0_23 = arith.constant 0 : index
      %c0_24 = arith.constant 0 : index
      %38 = vector.load %arg7[%c0_23, %c0_24] : memref<128x128xf32, #tpu.memory_space<vmem>>, vector<128x128xf32>
      tpu.vector_store %arg7[%c0_23, %c0_24], %37 {strides = array<i32>} : memref<128x128xf32, #tpu.memory_space<vmem>>, vector<128x128xf32>,
    } else {
    }
    return
  }
  func.func @transform_0(%arg0: i32, %arg1: i32) -> (i32, i32) {
    %c0_i32 = arith.constant 0 : i32
    %c0_i32_0 = arith.constant 0 : i32
    %c0_i32_1 = arith.constant 0 : i32
    return %c0_i32, %c0_i32_0 : i32, i32
  }
  func.func @transform_1(%arg0: i32, %arg1: i32) -> (i32, i32) {
    %c0_i32 = arith.constant 0 : i32
    return %arg0, %arg1 : i32, i32
  }
  func.func @transform_2(%arg0: i32, %arg1: i32) -> (i32, i32) {
    %c0_i32 = arith.constant 0 : i32
    %c0_i32_0 = arith.constant 0 : i32
    return %arg1, %c0_i32 : i32, i32
  }
  func.func @transform_3(%arg0: i32, %arg1: i32) -> (i32, i32) {
    %c0_i32 = arith.constant 0 : i32
    %c0_i32_0 = arith.constant 0 : i32
    %c0_i32_1 = arith.constant 0 : i32
    return %c0_i32, %c0_i32_0 : i32, i32
  }
  func.func @transform_4(%arg0: i32, %arg1: i32) -> (i32, i32) {
    %c0_i32 = arith.constant 0 : i32
    %c0_i32_0 = arith.constant 0 : i32
    %c0_i32_1 = arith.constant 0 : i32
    return %c0_i32, %c0_i32_0 : i32, i32
  }
  func.func @transform_5(%arg0: i32, %arg1: i32) -> (i32, i32) {
    %c0_i32 = arith.constant 0 : i32
    %c0_i32_0 = arith.constant 0 : i32
    return %arg0, %c0_i32 : i32, i32
  }
}

</mosaic_0001>

<llo_original>
// kernel: biomedclip_forward.1
$region0: #{biomedclip_forward.1}
  #allocation0 [shape = 'u32[]', space=smem, size = 0x4, offset = 0x4, fixed_abs, tag = 'smem constant byte address 0x4 - core index']
  #allocation1 [shape = 'u32[144,128]{1,0:T(1,128)}', space=vmem, size = 0x12000, scoped, tag = 'internal scratch']
  #allocation2 [shape = 'f32[128,128]{1,0:T(8,128)}', space=vmem, size = 0x10000, scoped, tag = 'scratch operand']
  #allocation3 [shape = 'f32[1,1]{1,0:T(1,128)S(6)}', space=smem, size = 0x200, scoped, tag = 'scoped memory for biomedclip_forward.1']
  %s0 = inlined_call_operand.<no memory space> [shape: f32[1,1], index: 0, kind: input, shape index: {}]
  %s1 = inlined_call_operand.vmem [shape: bf16[128,1024], index: 1, kind: input, shape index: {}]
  %s2 = inlined_call_operand.vmem [shape: bf16[1024,128], index: 2, kind: input, shape index: {}]
  %s3 = inlined_call_operand.vmem [shape: bf16[128,128], index: 3, kind: input, shape index: {}]
  %s4 = inlined_call_operand.vmem [shape: bf16[128,128], index: 4, kind: input, shape index: {}]
  %s5 = inlined_call_operand.vmem [shape: f32[128,128], index: 5, kind: output, shape index: {}]
  %s6 = sld [smem:[#allocation0]]
  $region84: #{biomedclip_forward.1} parent=0
    _
  %s8 = ssub.s32 1, %s6
  %s9 = scalar_select 0, %s8, %s6
  %10 = sst [smem:[#allocation3]] %s0
  $region1: #{biomedclip_forward.1} parent=0
    #allocation4 [shape = 'u8[262144]{0}', space=vmem, size = 0x40000, scoped, tag = 'input window, operand 1']
    loop: start=0, step=1, limit=4
    $region2: #{biomedclip_forward.1} parent=1 // loop_pre_header
      _
    $region3: #{biomedclip_forward.1} parent=1 // loop_header
      %s12 = sphi 0, %s16
      %p13 = scmp.ge.s32.totalorder %s12, 4
      %s19 = sphi 0, %s31
      %s20 = sphi 0, %s27
      %s21 = sphi 0, %s19
      %s22 = sphi 0, %s20
      %s23 = sphi 0, %s21
      %s24 = sphi 0, %s22
      %s32 = sphi 0, %s32
      %s34 = sphi 0, %s32
      %s35 = sphi 0, %s34
      %s49 = sphi 0, %s35
      %s57 = sphi 0, %s59
      %s60 = sphi 0, %s57
      %s61 = sphi 0, %s60
      %s77 = sphi 0, %s61
      %s83 = sphi 0, %s85
      %s86 = sphi 0, %s83
      %s87 = sphi 0, %s86
      %s103 = sphi 0, %s87
      %s107 = sphi 0, %s107
      %s109 = sphi 0, %s107
      %s110 = sphi 0, %s109
      %s124 = sphi 0, %s110
      %s128 = sphi 0, %s128
      %s130 = sphi 0, %s128
      %s131 = sphi 0, %s130
      %s145 = sphi 0, %s131
      %s151 = sphi 0, %s153
      %s154 = sphi 0, %s151
      %s155 = sphi 0, %s154
      %s171 = sphi 0, %s155
    $region4: #{biomedclip_forward.1} parent=1 // loop_header_branch
      %15 = sbr.rel (%p13) target = $region8
    $region5: #{biomedclip_forward.1} parent=1 // loop_body
      %s17 = ssub.s32 %s12, 1
      %s18 = ssub.s32 %s12, 2
      %s25 = sadd.s32 1, %s20
      %p26 = scmp.ge.s32.totalorder %s25, 2
      %s27 = scalar_select %p26, 0, %s25
      %s28 = sadd.s32 1, %s19
      %s29 = scalar_select %p26, %s28, %s19
      %p30 = scmp.ge.s32.totalorder %s29, 1
      %s31 = scalar_select %p30, 0, %s29
      %s33 = sadd.s32 %s32, 1
      %p36 = scmp.eq.s32.totalorder %s12, 1
      %p37 = scmp.ne.s32.totalorder %s32, %s34
      %p38 = scmp.eq.s32.totalorder %s12, 0
      %p39 = por %p37, %p38
      %p40 = scmp.ne.s32.totalorder %s32, %s34
      %p41 = scmp.eq.s32.totalorder %s17, 1
      %p42 = por %p40, %p41
      %p43 = scmp.ne.s32.totalorder %s34, %s35
      %p44 = scmp.eq.s32.totalorder %s17, 0
      %p45 = por %p43, %p44
      %p46 = scmp.ne.s32.totalorder %s34, %s35
      %p47 = scmp.eq.s32.totalorder %s18, 1
      %p48 = por %p46, %p47
      %p50 = scmp.ne.s32.totalorder %s35, %s49
      %p51 = scmp.eq.s32.totalorder %s18, 0
      %p52 = por %p50, %p51
      %s53 = ssub.s32 %s19, %s31
      %s54 = ssub.s32 %s20, %s27
      %s55 = sor.u32 %s53, %s54
      %p56 = scmp.eq.s32.totalorder %s55, 0
      %s58 = sadd.s32 %s57, 1
      %s59 = scalar_select %p56, %s57, %s58
      %p62 = pneg %p56
      %p63 = scmp.eq.s32.totalorder %s12, 1
      %p64 = por %p62, %p63
      %p65 = scmp.ne.s32.totalorder %s57, %s60
      %p66 = scmp.eq.s32.totalorder %s12, 0
      %p67 = por %p65, %p66
      %p68 = scmp.ne.s32.totalorder %s57, %s60
      %p69 = scmp.eq.s32.totalorder %s17, 1
      %p70 = por %p68, %p69
      %p71 = scmp.ne.s32.totalorder %s60, %s61
      %p72 = scmp.eq.s32.totalorder %s17, 0
      %p73 = por %p71, %p72
      %p74 = scmp.ne.s32.totalorder %s60, %s61
      %p75 = scmp.eq.s32.totalorder %s18, 1
      %p76 = por %p74, %p75
      %p78 = scmp.ne.s32.totalorder %s61, %s77
      %p79 = scmp.eq.s32.totalorder %s18, 0
      %p80 = por %p78, %p79
      %s81 = ssub.s32 %s20, %s27
      %p82 = scmp.eq.s32.totalorder %s81, 0
      %s84 = sadd.s32 %s83, 1
      %s85 = scalar_select %p82, %s83, %s84
      %p88 = pneg %p82
      %p89 = scmp.eq.s32.totalorder %s12, 1
      %p90 = por %p88, %p89
      %p91 = scmp.ne.s32.totalorder %s83, %s86
      %p92 = scmp.eq.s32.totalorder %s12, 0
      %p93 = por %p91, %p92
      %p94 = scmp.ne.s32.totalorder %s83, %s86
      %p95 = scmp.eq.s32.totalorder %s17, 1
      %p96 = por %p94, %p95
      %p97 = scmp.ne.s32.totalorder %s86, %s87
      %p98 = scmp.eq.s32.totalorder %s17, 0
      %p99 = por %p97, %p98
      %p100 = scmp.ne.s32.totalorder %s86, %s87
      %p101 = scmp.eq.s32.totalorder %s18, 1
      %p102 = por %p100, %p101
      %p104 = scmp.ne.s32.totalorder %s87, %s103
      %p105 = scmp.eq.s32.totalorder %s18, 0
      %p106 = por %p104, %p105
      %s108 = sadd.s32 %s107, 1
      %p111 = scmp.eq.s32.totalorder %s12, 1
      %p112 = scmp.ne.s32.totalorder %s107, %s109
      %p113 = scmp.eq.s32.totalorder %s12, 0
      %p114 = por %p112, %p113
      %p115 = scmp.ne.s32.totalorder %s107, %s109
      %p116 = scmp.eq.s32.totalorder %s17, 1
      %p117 = por %p115, %p116
      %p118 = scmp.ne.s32.totalorder %s109, %s110
      %p119 = scmp.eq.s32.totalorder %s17, 0
      %p120 = por %p118, %p119
      %p121 = scmp.ne.s32.totalorder %s109, %s110
      %p122 = scmp.eq.s32.totalorder %s18, 1
      %p123 = por %p121, %p122
      %p125 = scmp.ne.s32.totalorder %s110, %s124
      %p126 = scmp.eq.s32.totalorder %s18, 0
      %p127 = por %p125, %p126
      %s129 = sadd.s32 %s128, 1
      %p132 = scmp.eq.s32.totalorder %s12, 1
      %p133 = scmp.ne.s32.totalorder %s128, %s130
      %p134 = scmp.eq.s32.totalorder %s12, 0
      %p135 = por %p133, %p134
      %p136 = scmp.ne.s32.totalorder %s128, %s130
      %p137 = scmp.eq.s32.totalorder %s17, 1
      %p138 = por %p136, %p137
      %p139 = scmp.ne.s32.totalorder %s130, %s131
      %p140 = scmp.eq.s32.totalorder %s17, 0
      %p141 = por %p139, %p140
      %p142 = scmp.ne.s32.totalorder %s130, %s131
      %p143 = scmp.eq.s32.totalorder %s18, 1
      %p144 = por %p142, %p143
      %p146 = scmp.ne.s32.totalorder %s131, %s145
      %p147 = scmp.eq.s32.totalorder %s18, 0
      %p148 = por %p146, %p147
      %s149 = ssub.s32 %s19, %s31
      %p150 = scmp.eq.s32.totalorder %s149, 0
      %s152 = sadd.s32 %s151, 1
      %s153 = scalar_select %p150, %s151, %s152
      %p156 = pneg %p150
      %p157 = scmp.eq.s32.totalorder %s12, 1
      %p158 = por %p156, %p157
      %p159 = scmp.ne.s32.totalorder %s151, %s154
      %p160 = scmp.eq.s32.totalorder %s12, 0
      %p161 = por %p159, %p160
      %p162 = scmp.ne.s32.totalorder %s151, %s154
      %p163 = scmp.eq.s32.totalorder %s17, 1
      %p164 = por %p162, %p163
      %p165 = scmp.ne.s32.totalorder %s154, %s155
      %p166 = scmp.eq.s32.totalorder %s17, 0
      %p167 = por %p165, %p166
      %p168 = scmp.ne.s32.totalorder %s154, %s155
      %p169 = scmp.eq.s32.totalorder %s18, 1
      %p170 = por %p168, %p169
      %p172 = scmp.ne.s32.totalorder %s155, %s171
      %p173 = scmp.eq.s32.totalorder %s18, 0
      %p174 = por %p172, %p173
      %p175 = scmp.le.s32.totalorder 1, %s12
      %p176 = scmp.lt.s32.totalorder %s12, 3
      %p177 = pnand %p175, %p176
      %p178 = pneg %p177
      // Predicated region
      $region9: #{biomedclip_forward.1} parent=5 // pred_check
        _
      $region10: #{biomedclip_forward.1} parent=5 // pred_check_branch
        %180 = sbr.rel (%p177) target = $region12
      $region11: #{biomedclip_forward.1} parent=5 // pred_region
        %s181 = ssub.s32 %s12, 1
        // Predicated region
        $region13: #{biomedclip_forward.1} parent=11 // pred_check
          %p182 = pneg %p45
        $region14: #{biomedclip_forward.1} parent=11 // pred_check_branch
          %184 = sbr.rel (%p182) target = $region16
        $region15: #{biomedclip_forward.1} parent=11 // pred_region
          _
        $region16: #{biomedclip_forward.1} parent=11 // pred_fallthru
          _
        // Predicated region
        $region17: #{biomedclip_forward.1} parent=11 // pred_check
          %p185 = pneg %p120
        $region18: #{biomedclip_forward.1} parent=11 // pred_check_branch
          %187 = sbr.rel (%p185) target = $region20
        $region19: #{biomedclip_forward.1} parent=11 // pred_region
          _
        $region20: #{biomedclip_forward.1} parent=11 // pred_fallthru
          _
        // Predicated region
        $region21: #{biomedclip_forward.1} parent=11 // pred_check
          %p188 = pneg %p141
        $region22: #{biomedclip_forward.1} parent=11 // pred_check_branch
          %190 = sbr.rel (%p188) target = $region24
        $region23: #{biomedclip_forward.1} parent=11 // pred_region
          _
        $region24: #{biomedclip_forward.1} parent=11 // pred_fallthru
          _
      $region12: #{biomedclip_forward.1} parent=5 // pred_fallthru
        _
      %p191 = scmp.lt.s32.totalorder %s12, 2
      // Predicated region
      $region25: #{biomedclip_forward.1} parent=5 // pred_check
        %p192 = pneg %p191
      $region26: #{biomedclip_forward.1} parent=5 // pred_check_branch
        %194 = sbr.rel (%p192) target = $region28
      $region27: #{biomedclip_forward.1} parent=5 // pred_region
        // Predicated region
        $region29: #{biomedclip_forward.1} parent=27 // pred_check
          %p195 = pneg %p67
        $region30: #{biomedclip_forward.1} parent=27 // pred_check_branch
          %197 = sbr.rel (%p195) target = $region32
        $region31: #{biomedclip_forward.1} parent=27 // pred_region
          %s198 = sand.u32 %s57, 1
          %s199 = sand.u32 %s57, 1
          %s200 = smul.addr %s199, 256
          %s201 = scalar_lea.vmem [#allocation4], %s200
          %s202 = smul.u32 16, %s19
          %s203 = smul.u32 4, %s20
          %s204 = smul.addr %s202, 8
          %s205 = sadd.s32 %s203, %s204
          %s206 = smul.addr %s205, 4
          %s207 = scalar_lea.vmem %s1, %s206
          // Predicated region
          $region33: #{biomedclip_forward.1} parent=31 // pred_check
            _
          $region34: #{biomedclip_forward.1} parent=31 // pred_check_branch
            %209 = sbr.rel (0) target = $region36
          $region35: #{biomedclip_forward.1} parent=31 // pred_region
            // Predicated region
            $region37: #{biomedclip_forward.1} parent=35 // pred_check
              _
            $region38: #{biomedclip_forward.1} parent=35 // pred_check_branch
              %211 = sbr.rel (0) target = $region40
            $region39: #{biomedclip_forward.1} parent=35 // pred_region
              loop: start=0, step=1, limit=1
              $region41: #{biomedclip_forward.1} parent=39 // loop_pre_header
                _
              $region42: #{biomedclip_forward.1} parent=39 // loop_header
                %s213 = sphi 0, %s217
                %p214 = scmp.ge.s32.totalorder %s213, 1
                %s218 = sphi %s207, %s207
                %s219 = sphi %s201, %s201
              $region43: #{biomedclip_forward.1} parent=39 // loop_header_branch
                %216 = sbr.rel (%p214) target = $region47
              $region44: #{biomedclip_forward.1} parent=39 // loop_body
                %v220 = vld [vmem:[%s218] sm:$0xff]
                %221 = vst [vmem:[%s219] sm:$0xff] %v220
                %v222 = vld [vmem:[%s218 + $0x8] sm:$0xff]
                %223 = vst [vmem:[%s219 + $0x8] sm:$0xff] %v222
                %v224 = vld [vmem:[%s218 + $0x20] sm:$0xff]
                %225 = vst [vmem:[%s219 + $0x10] sm:$0xff] %v224
                %v226 = vld [vmem:[%s218 + $0x28] sm:$0xff]
                %227 = vst [vmem:[%s219 + $0x18] sm:$0xff] %v226
                %v228 = vld [vmem:[%s218 + $0x40] sm:$0xff]
                %229 = vst [vmem:[%s219 + $0x20] sm:$0xff] %v228
                %v230 = vld [vmem:[%s218 + $0x48] sm:$0xff]
                %231 = vst [vmem:[%s219 + $0x28] sm:$0xff] %v230
                %v232 = vld [vmem:[%s218 + $0x60] sm:$0xff]
                %233 = vst [vmem:[%s219 + $0x30] sm:$0xff] %v232
                %v234 = vld [vmem:[%s218 + $0x68] sm:$0xff]
                %235 = vst [vmem:[%s219 + $0x38] sm:$0xff] %v234
                %v236 = vld [vmem:[%s218 + $0x80] sm:$0xff]
                %237 = vst [vmem:[%s219 + $0x40] sm:$0xff] %v236
                %v238 = vld [vmem:[%s218 + $0x88] sm:$0xff]
                %239 = vst [vmem:[%s219 + $0x48] sm:$0xff] %v238
                %v240 = vld [vmem:[%s218 + $0xa0] sm:$0xff]
                %241 = vst [vmem:[%s219 + $0x50] sm:$0xff] %v240
                %v242 = vld [vmem:[%s218 + $0xa8] sm:$0xff]
                %243 = vst [vmem:[%s219 + $0x58] sm:$0xff] %v242
                %v244 = vld [vmem:[%s218 + $0xc0] sm:$0xff]
                %245 = vst [vmem:[%s219 + $0x60] sm:$0xff] %v244
                %v246 = vld [vmem:[%s218 + $0xc8] sm:$0xff]
                %247 = vst [vmem:[%s219 + $0x68] sm:$0xff] %v246
                %v248 = vld [vmem:[%s218 + $0xe0] sm:$0xff]
                %249 = vst [vmem:[%s219 + $0x70] sm:$0xff] %v248
                %v250 = vld [vmem:[%s218 + $0xe8] sm:$0xff]
                %251 = vst [vmem:[%s219 + $0x78] sm:$0xff] %v250
                %v252 = vld [vmem:[%s218 + $0x100] sm:$0xff]
                %253 = vst [vmem:[%s219 + $0x80] sm:$0xff] %v252
                %v254 = vld [vmem:[%s218 + $0x108] sm:$0xff]
                %255 = vst [vmem:[%s219 + $0x88] sm:$0xff] %v254
                %v256 = vld [vmem:[%s218 + $0x120] sm:$0xff]
                %257 = vst [vmem:[%s219 + $0x90] sm:$0xff] %v256
                %v258 = vld [vmem:[%s218 + $0x128] sm:$0xff]
                %259 = vst [vmem:[%s219 + $0x98] sm:$0xff] %v258
                %v260 = vld [vmem:[%s218 + $0x140] sm:$0xff]
                %261 = vst [vmem:[%s219 + $0xa0] sm:$0xff] %v260
                %v262 = vld [vmem:[%s218 + $0x148] sm:$0xff]
                %263 = vst [vmem:[%s219 + $0xa8] sm:$0xff] %v262
                %v264 = vld [vmem:[%s218 + $0x160] sm:$0xff]
                %265 = vst [vmem:[%s219 + $0xb0] sm:$0xff] %v264
                %v266 = vld [vmem:[%s218 + $0x168] sm:$0xff]
                %267 = vst [vmem:[%s219 + $0xb8] sm:$0xff] %v266
                %v268 = vld [vmem:[%s218 + $0x180] sm:$0xff]
                %269 = vst [vmem:[%s219 + $0xc0] sm:$0xff] %v268
                %v270 = vld [vmem:[%s218 + $0x188] sm:$0xff]
                %271 = vst [vmem:[%s219 + $0xc8] sm:$0xff] %v270
                %v272 = vld [vmem:[%s218 + $0x1a0] sm:$0xff]
                %273 = vst [vmem:[%s219 + $0xd0] sm:$0xff] %v272
                %v274 = vld [vmem:[%s218 + $0x1a8] sm:$0xff]
                %275 = vst [vmem:[%s219 + $0xd8] sm:$0xff] %v274
                %v276 = vld [vmem:[%s218 + $0x1c0] sm:$0xff]
                %277 = vst [vmem:[%s219 + $0xe0] sm:$0xff] %v276
                %v278 = vld [vmem:[%s218 + $0x1c8] sm:$0xff]
                %279 = vst [vmem:[%s219 + $0xe8] sm:$0xff] %v278
                %v280 = vld [vmem:[%s218 + $0x1e0] sm:$0xff]
                %281 = vst [vmem:[%s219 + $0xf0] sm:$0xff] %v280
                %v282 = vld [vmem:[%s218 + $0x1e8] sm:$0xff]
                %283 = vst [vmem:[%s219 + $0xf8] sm:$0xff] %v282
              $region45: #{biomedclip_forward.1} parent=39 // loop_footer
                %s217 = sadd.s32 1, %s213
              $region46: #{biomedclip_forward.1} parent=39 // loop_footer_branch
                %212 = sbr.rel target = $region42
              $region47: #{biomedclip_forward.1} parent=39 // loop_exit
                _
            $region40: #{biomedclip_forward.1} parent=35 // pred_fallthru
              _
            // Predicated region
            $region48: #{biomedclip_forward.1} parent=35 // pred_check
              _
            $region49: #{biomedclip_forward.1} parent=35 // pred_check_branch
              %285 = sbr.rel target = $region51
            $region50: #{biomedclip_forward.1} parent=35 // pred_region
              _
            $region51: #{biomedclip_forward.1} parent=35 // pred_fallthru
              _
          $region36: #{biomedclip_forward.1} parent=31 // pred_fallthru
            _
          %286 = vnop
        $region32: #{biomedclip_forward.1} parent=27 // pred_fallthru
          _
        // Predicated region
        $region52: #{biomedclip_forward.1} parent=27 // pred_check
          %p287 = pneg %p93
        $region53: #{biomedclip_forward.1} parent=27 // pred_check_branch
          %289 = sbr.rel (%p287) target = $region55
        $region54: #{biomedclip_forward.1} parent=27 // pred_region
          %s290 = smul.u32 64, %s20
          %p291 = scmp.lt.s32.totalorder %s290, 127
          %s292 = scalar_select %p291, %s290, 127
          %s293 = smul.addr %s292, 4
          %s294 = scalar_lea.vmem %s2, %s293
          %s295 = smul.u32 64, %s20
        $region55: #{biomedclip_forward.1} parent=27 // pred_fallthru
          _
      $region28: #{biomedclip_forward.1} parent=5 // pred_fallthru
        _
      %p296 = scmp.le.s32.totalorder 1, %s12
      %p297 = scmp.lt.s32.totalorder %s12, 3
      %p298 = pnand %p296, %p297
      %p299 = pneg %p298
      // Predicated region
      $region56: #{biomedclip_forward.1} parent=5 // pred_check
        _
      $region57: #{biomedclip_forward.1} parent=5 // pred_check_branch
        %301 = sbr.rel (%p298) target = $region59
      $region58: #{biomedclip_forward.1} parent=5 // pred_region
        %s302 = ssub.s32 %s12, 1
        %s303 = sand.u32 %s60, 1
        %s304 = sand.u32 %s60, 1
        %s305 = smul.addr %s304, 256
        %s306 = scalar_lea.vmem [#allocation4], %s305
        // Predicated region
        $region60: #{biomedclip_forward.1} parent=58 // pred_check
          %p307 = pneg %p73
        $region61: #{biomedclip_forward.1} parent=58 // pred_check_branch
          %309 = sbr.rel (%p307) target = $region63
        $region62: #{biomedclip_forward.1} parent=58 // pred_region
          _
        $region63: #{biomedclip_forward.1} parent=58 // pred_fallthru
          _
        %p310 = pneg %p45
        %p311 = pneg %p42
        %s312 = sand.u32 %s60, 1
        %s313 = sand.u32 %s60, 1
        %s314 = smul.addr %s313, 256
        %s315 = scalar_lea.vmem [#allocation4], %s314
        %p316 = pneg %p73
        %p317 = pneg %p70
        %s318 = smul.u32 64, %s22
        %p319 = scmp.lt.s32.totalorder %s318, 127
        %s320 = scalar_select %p319, %s318, 127
        %s321 = smul.addr %s320, 4
        %s322 = scalar_lea.vmem %s2, %s321
        %p323 = pneg %p99
        %p324 = pneg %p96
        %p325 = pneg %p120
        %p326 = pneg %p117
        %p327 = pneg %p141
        %p328 = pneg %p138
        %p329 = pneg %p167
        %p330 = pneg %p164
        %s331 = smul.u32 16, %s21
        %p332 = scmp.lt.s32.totalorder %s331, 15
        %s333 = scalar_select %p332, %s331, 15
        %s334 = smul.addr %s333, 8
        %s335 = scalar_lea.vmem %s5, %s334
        %s336 = smul.u32 16, %s21
        %s337 = smul.u32 4, %s22
        %s338 = smul.u32 64, %s22
        %p339 = scmp.lt.s32.totalorder %s338, 127
        %s340 = scalar_select %p339, %s338, 127
        %s341 = smul.addr %s340, 4
        %s342 = scalar_lea.vmem %s2, %s341
        %s343 = smul.u32 64, %s22
        %s344 = smul.u32 16, %s21
        %p345 = scmp.lt.s32.totalorder %s344, 15
        %s346 = scalar_select %p345, %s344, 15
        %s347 = smul.addr %s346, 8
        %s348 = scalar_lea.vmem %s5, %s347
        %s349 = smul.u32 16, %s21
        %p351 = scmp.eq.s32.totalorder %s22, 0
        // Predicated region
        $region64: #{biomedclip_forward.1} parent=58 // pred_check
          %p352 = pneg %p351
        $region65: #{biomedclip_forward.1} parent=58 // pred_check_branch
          %354 = sbr.rel (%p352) target = $region67
        $region66: #{biomedclip_forward.1} parent=58 // pred_region
          %355 = vst [vmem:[#allocation2] sm:$0xff] 0.0
          %356 = vst [vmem:[#allocation2 + $0x8] sm:$0xff] 0.0
          %357 = vst [vmem:[#allocation2 + $0x10] sm:$0xff] 0.0
          %358 = vst [vmem:[#allocation2 + $0x18] sm:$0xff] 0.0
          %359 = vst [vmem:[#allocation2 + $0x20] sm:$0xff] 0.0
          %360 = vst [vmem:[#allocation2 + $0x28] sm:$0xff] 0.0
          %361 = vst [vmem:[#allocation2 + $0x30] sm:$0xff] 0.0
          %362 = vst [vmem:[#allocation2 + $0x38] sm:$0xff] 0.0
          %363 = vst [vmem:[#allocation2 + $0x40] sm:$0xff] 0.0
          %364 = vst [vmem:[#allocation2 + $0x48] sm:$0xff] 0.0
          %365 = vst [vmem:[#allocation2 + $0x50] sm:$0xff] 0.0
          %366 = vst [vmem:[#allocation2 + $0x58] sm:$0xff] 0.0
          %367 = vst [vmem:[#allocation2 + $0x60] sm:$0xff] 0.0
          %368 = vst [vmem:[#allocation2 + $0x68] sm:$0xff] 0.0
          %369 = vst [vmem:[#allocation2 + $0x70] sm:$0xff] 0.0
          %370 = vst [vmem:[#allocation2 + $0x78] sm:$0xff] 0.0
        $region67: #{biomedclip_forward.1} parent=58 // pred_fallthru
          _
        %v371 = vld [vmem:[#allocation2] sm:$0xff]
        %v372 = vld [vmem:[#allocation2 + $0x8] sm:$0xff]
        %v373 = vld [vmem:[#allocation2 + $0x10] sm:$0xff]
        %v374 = vld [vmem:[#allocation2 + $0x18] sm:$0xff]
        %v375 = vld [vmem:[#allocation2 + $0x20] sm:$0xff]
        %v376 = vld [vmem:[#allocation2 + $0x28] sm:$0xff]
        %v377 = vld [vmem:[#allocation2 + $0x30] sm:$0xff]
        %v378 = vld [vmem:[#allocation2 + $0x38] sm:$0xff]
        %v379 = vld [vmem:[#allocation2 + $0x40] sm:$0xff]
        %v380 = vld [vmem:[#allocation2 + $0x48] sm:$0xff]
        %v381 = vld [vmem:[#allocation2 + $0x50] sm:$0xff]
        %v382 = vld [vmem:[#allocation2 + $0x58] sm:$0xff]
        %v383 = vld [vmem:[#allocation2 + $0x60] sm:$0xff]
        %v384 = vld [vmem:[#allocation2 + $0x68] sm:$0xff]
        %v385 = vld [vmem:[#allocation2 + $0x70] sm:$0xff]
        %v386 = vld [vmem:[#allocation2 + $0x78] sm:$0xff]
        %v387 = vld [vmem:[%s306] sm:$0xff]
        %v388 = vld [vmem:[%s306 + $0x8] sm:$0xff]
        %v389 = vld [vmem:[%s306 + $0x10] sm:$0xff]
        %v390 = vld [vmem:[%s306 + $0x18] sm:$0xff]
        %v391 = vld [vmem:[%s306 + $0x20] sm:$0xff]
        %v392 = vld [vmem:[%s306 + $0x28] sm:$0xff]
        %v393 = vld [vmem:[%s306 + $0x30] sm:$0xff]
        %v394 = vld [vmem:[%s306 + $0x38] sm:$0xff]
        %v395 = vld [vmem:[%s306 + $0x40] sm:$0xff]
        %v396 = vld [vmem:[%s306 + $0x48] sm:$0xff]
        %v397 = vld [vmem:[%s306 + $0x50] sm:$0xff]
        %v398 = vld [vmem:[%s306 + $0x58] sm:$0xff]
        %v399 = vld [vmem:[%s306 + $0x60] sm:$0xff]
        %v400 = vld [vmem:[%s306 + $0x68] sm:$0xff]
        %v401 = vld [vmem:[%s306 + $0x70] sm:$0xff]
        %v402 = vld [vmem:[%s306 + $0x78] sm:$0xff]
        %v403 = vld [vmem:[%s306 + $0x80] sm:$0xff]
        %v404 = vld [vmem:[%s306 + $0x88] sm:$0xff]
        %v405 = vld [vmem:[%s306 + $0x90] sm:$0xff]
        %v406 = vld [vmem:[%s306 + $0x98] sm:$0xff]
        %v407 = vld [vmem:[%s306 + $0xa0] sm:$0xff]
        %v408 = vld [vmem:[%s306 + $0xa8] sm:$0xff]
        %v409 = vld [vmem:[%s306 + $0xb0] sm:$0xff]
        %v410 = vld [vmem:[%s306 + $0xb8] sm:$0xff]
        %v411 = vld [vmem:[%s306 + $0xc0] sm:$0xff]
        %v412 = vld [vmem:[%s306 + $0xc8] sm:$0xff]
        %v413 = vld [vmem:[%s306 + $0xd0] sm:$0xff]
        %v414 = vld [vmem:[%s306 + $0xd8] sm:$0xff]
        %v415 = vld [vmem:[%s306 + $0xe0] sm:$0xff]
        %v416 = vld [vmem:[%s306 + $0xe8] sm:$0xff]
        %v417 = vld [vmem:[%s306 + $0xf0] sm:$0xff]
        %v418 = vld [vmem:[%s306 + $0xf8] sm:$0xff]
        %v419 = vld [vmem:[%s342] sm:$0xf]
        %v420 = vld [vmem:[%s342 + $0x4] sm:$0xf]
        %v421 = vld [vmem:[%s342 + $0x8] sm:$0xf]
        %v422 = vld [vmem:[%s342 + $0xc] sm:$0xf]
        %v423 = vld [vmem:[%s342 + $0x10] sm:$0xf]
        %v424 = vld [vmem:[%s342 + $0x14] sm:$0xf]
        %v425 = vld [vmem:[%s342 + $0x18] sm:$0xf]
        %v426 = vld [vmem:[%s342 + $0x1c] sm:$0xf]
        %v427 = vld [vmem:[%s342 + $0x20] sm:$0xf]
        %v428 = vld [vmem:[%s342 + $0x24] sm:$0xf]
        %v429 = vld [vmem:[%s342 + $0x28] sm:$0xf]
        %v430 = vld [vmem:[%s342 + $0x2c] sm:$0xf]
        %v431 = vld [vmem:[%s342 + $0x30] sm:$0xf]
        %v432 = vld [vmem:[%s342 + $0x34] sm:$0xf]
        %v433 = vld [vmem:[%s342 + $0x38] sm:$0xf]
        %v434 = vld [vmem:[%s342 + $0x3c] sm:$0xf]
        %v435 = vld [vmem:[%s342 + $0x40] sm:$0xf]
        %v436 = vld [vmem:[%s342 + $0x44] sm:$0xf]
        %v437 = vld [vmem:[%s342 + $0x48] sm:$0xf]
        %v438 = vld [vmem:[%s342 + $0x4c] sm:$0xf]
        %v439 = vld [vmem:[%s342 + $0x50] sm:$0xf]
        %v440 = vld [vmem:[%s342 + $0x54] sm:$0xf]
        %v441 = vld [vmem:[%s342 + $0x58] sm:$0xf]
        %v442 = vld [vmem:[%s342 + $0x5c] sm:$0xf]
        %v443 = vld [vmem:[%s342 + $0x60] sm:$0xf]
        %v444 = vld [vmem:[%s342 + $0x64] sm:$0xf]
        %v445 = vld [vmem:[%s342 + $0x68] sm:$0xf]
        %v446 = vld [vmem:[%s342 + $0x6c] sm:$0xf]
        %v447 = vld [vmem:[%s342 + $0x70] sm:$0xf]
        %v448 = vld [vmem:[%s342 + $0x74] sm:$0xf]
        %v449 = vld [vmem:[%s342 + $0x78] sm:$0xf]
        %v450 = vld [vmem:[%s342 + $0x7c] sm:$0xf]
        %v451 = vld [vmem:[%s342 + $0x80] sm:$0xf]
        %v452 = vld [vmem:[%s342 + $0x84] sm:$0xf]
        %v453 = vld [vmem:[%s342 + $0x88] sm:$0xf]
        %v454 = vld [vmem:[%s342 + $0x8c] sm:$0xf]
        %v455 = vld [vmem:[%s342 + $0x90] sm:$0xf]
        %v456 = vld [vmem:[%s342 + $0x94] sm:$0xf]
        %v457 = vld [vmem:[%s342 + $0x98] sm:$0xf]
        %v458 = vld [vmem:[%s342 + $0x9c] sm:$0xf]
        %v459 = vld [vmem:[%s342 + $0xa0] sm:$0xf]
        %v460 = vld [vmem:[%s342 + $0xa4] sm:$0xf]
        %v461 = vld [vmem:[%s342 + $0xa8] sm:$0xf]
        %v462 = vld [vmem:[%s342 + $0xac] sm:$0xf]
        %v463 = vld [vmem:[%s342 + $0xb0] sm:$0xf]
        %v464 = vld [vmem:[%s342 + $0xb4] sm:$0xf]
        %v465 = vld [vmem:[%s342 + $0xb8] sm:$0xf]
        %v466 = vld [vmem:[%s342 + $0xbc] sm:$0xf]
        %v467 = vld [vmem:[%s342 + $0xc0] sm:$0xf]
        %v468 = vld [vmem:[%s342 + $0xc4] sm:$0xf]
        %v469 = vld [vmem:[%s342 + $0xc8] sm:$0xf]
        %v470 = vld [vmem:[%s342 + $0xcc] sm:$0xf]
        %v471 = vld [vmem:[%s342 + $0xd0] sm:$0xf]
        %v472 = vld [vmem:[%s342 + $0xd4] sm:$0xf]
        %v473 = vld [vmem:[%s342 + $0xd8] sm:$0xf]
        %v474 = vld [vmem:[%s342 + $0xdc] sm:$0xf]
        %v475 = vld [vmem:[%s342 + $0xe0] sm:$0xf]
        %v476 = vld [vmem:[%s342 + $0xe4] sm:$0xf]
        %v477 = vld [vmem:[%s342 + $0xe8] sm:$0xf]
        %v478 = vld [vmem:[%s342 + $0xec] sm:$0xf]
        %v479 = vld [vmem:[%s342 + $0xf0] sm:$0xf]
        %v480 = vld [vmem:[%s342 + $0xf4] sm:$0xf]
        %v481 = vld [vmem:[%s342 + $0xf8] sm:$0xf]
        %v482 = vld [vmem:[%s342 + $0xfc] sm:$0xf]
        %v515 = vunpack.c.l.b16 %v387
        %v516 = vunpack.c.h.b16 %v387
        %v517 = vunpack.c.l.b16 %v388
        %v518 = vunpack.c.h.b16 %v388
        %v519 = vunpack.c.l.b16 %v389
        %v520 = vunpack.c.h.b16 %v389
        %v521 = vunpack.c.l.b16 %v390
        %v522 = vunpack.c.h.b16 %v390
        %v523 = vunpack.c.l.b16 %v391
        %v524 = vunpack.c.h.b16 %v391
        %v525 = vunpack.c.l.b16 %v392
        %v526 = vunpack.c.h.b16 %v392
        %v527 = vunpack.c.l.b16 %v393
        %v528 = vunpack.c.h.b16 %v393
        %v529 = vunpack.c.l.b16 %v394
        %v530 = vunpack.c.h.b16 %v394
        %v531 = vunpack.c.l.b16 %v395
        %v532 = vunpack.c.h.b16 %v395
        %v533 = vunpack.c.l.b16 %v396
        %v534 = vunpack.c.h.b16 %v396
        %v535 = vunpack.c.l.b16 %v397
        %v536 = vunpack.c.h.b16 %v397
        %v537 = vunpack.c.l.b16 %v398
        %v538 = vunpack.c.h.b16 %v398
        %v539 = vunpack.c.l.b16 %v399
        %v540 = vunpack.c.h.b16 %v399
        %v541 = vunpack.c.l.b16 %v400
        %v542 = vunpack.c.h.b16 %v400
        %v543 = vunpack.c.l.b16 %v401
        %v544 = vunpack.c.h.b16 %v401
        %v545 = vunpack.c.l.b16 %v402
        %v546 = vunpack.c.h.b16 %v402
        %v547 = vunpack.c.l.b16 %v403
        %v548 = vunpack.c.h.b16 %v403
        %v549 = vunpack.c.l.b16 %v404
        %v550 = vunpack.c.h.b16 %v404
        %v551 = vunpack.c.l.b16 %v405
        %v552 = vunpack.c.h.b16 %v405
        %v553 = vunpack.c.l.b16 %v406
        %v554 = vunpack.c.h.b16 %v406
        %v555 = vunpack.c.l.b16 %v407
        %v556 = vunpack.c.h.b16 %v407
        %v557 = vunpack.c.l.b16 %v408
        %v558 = vunpack.c.h.b16 %v408
        %v559 = vunpack.c.l.b16 %v409
        %v560 = vunpack.c.h.b16 %v409
        %v561 = vunpack.c.l.b16 %v410
        %v562 = vunpack.c.h.b16 %v410
        %v563 = vunpack.c.l.b16 %v411
        %v564 = vunpack.c.h.b16 %v411
        %v565 = vunpack.c.l.b16 %v412
        %v566 = vunpack.c.h.b16 %v412
        %v567 = vunpack.c.l.b16 %v413
        %v568 = vunpack.c.h.b16 %v413
        %v569 = vunpack.c.l.b16 %v414
        %v570 = vunpack.c.h.b16 %v414
        %v571 = vunpack.c.l.b16 %v415
        %v572 = vunpack.c.h.b16 %v415
        %v573 = vunpack.c.l.b16 %v416
        %v574 = vunpack.c.h.b16 %v416
        %v575 = vunpack.c.l.b16 %v417
        %v576 = vunpack.c.h.b16 %v417
        %v577 = vunpack.c.l.b16 %v418
        %v578 = vunpack.c.h.b16 %v418
        %v579 = vpack.c.b16 %v519, %v515
        %v580 = vpack.c.b16 %v520, %v516
        %v581 = vpack.c.b16 %v521, %v517
        %v582 = vpack.c.b16 %v522, %v518
        %v583 = vpack.c.b16 %v527, %v523
        %v584 = vpack.c.b16 %v528, %v524
        %v585 = vpack.c.b16 %v529, %v525
        %v586 = vpack.c.b16 %v530, %v526
        %v587 = vpack.c.b16 %v535, %v531
        %v588 = vpack.c.b16 %v536, %v532
        %v589 = vpack.c.b16 %v537, %v533
        %v590 = vpack.c.b16 %v538, %v534
        %v591 = vpack.c.b16 %v543, %v539
        %v592 = vpack.c.b16 %v544, %v540
        %v593 = vpack.c.b16 %v545, %v541
        %v594 = vpack.c.b16 %v546, %v542
        %v595 = vpack.c.b16 %v551, %v547
        %v596 = vpack.c.b16 %v552, %v548
        %v597 = vpack.c.b16 %v553, %v549
        %v598 = vpack.c.b16 %v554, %v550
        %v599 = vpack.c.b16 %v559, %v555
        %v600 = vpack.c.b16 %v560, %v556
        %v601 = vpack.c.b16 %v561, %v557
        %v602 = vpack.c.b16 %v562, %v558
        %v603 = vpack.c.b16 %v567, %v563
        %v604 = vpack.c.b16 %v568, %v564
        %v605 = vpack.c.b16 %v569, %v565
        %v606 = vpack.c.b16 %v570, %v566
        %v607 = vpack.c.b16 %v575, %v571
        %v608 = vpack.c.b16 %v576, %v572
        %v609 = vpack.c.b16 %v577, %v573
        %v610 = vpack.c.b16 %v578, %v574
        %v707 = vunpack.c.l.b16 %v419
        %v708 = vunpack.c.l.b16 %v420
        %v709 = vunpack.c.l.b16 %v421
        %v710 = vunpack.c.l.b16 %v422
        %v711 = vunpack.c.l.b16 %v423
        %v712 = vunpack.c.l.b16 %v424
        %v713 = vunpack.c.l.b16 %v425
        %v714 = vunpack.c.l.b16 %v426
        %v715 = vunpack.c.l.b16 %v427
        %v716 = vunpack.c.l.b16 %v428
        %v717 = vunpack.c.l.b16 %v429
        %v718 = vunpack.c.l.b16 %v430
        %v719 = vunpack.c.l.b16 %v431
        %v720 = vunpack.c.l.b16 %v432
        %v721 = vunpack.c.l.b16 %v433
        %v722 = vunpack.c.l.b16 %v434
        %v723 = vunpack.c.l.b16 %v435
        %v724 = vunpack.c.l.b16 %v436
        %v725 = vunpack.c.l.b16 %v437
        %v726 = vunpack.c.l.b16 %v438
        %v727 = vunpack.c.l.b16 %v439
        %v728 = vunpack.c.l.b16 %v440
        %v729 = vunpack.c.l.b16 %v441
        %v730 = vunpack.c.l.b16 %v442
        %v731 = vunpack.c.l.b16 %v443
        %v732 = vunpack.c.l.b16 %v444
        %v733 = vunpack.c.l.b16 %v445
        %v734 = vunpack.c.l.b16 %v446
        %v735 = vunpack.c.l.b16 %v447
        %v736 = vunpack.c.l.b16 %v448
        %v737 = vunpack.c.l.b16 %v449
        %v738 = vunpack.c.l.b16 %v450
        %v739 = vunpack.c.l.b16 %v451
        %v740 = vunpack.c.l.b16 %v452
        %v741 = vunpack.c.l.b16 %v453
        %v742 = vunpack.c.l.b16 %v454
        %v743 = vunpack.c.l.b16 %v455
        %v744 = vunpack.c.l.b16 %v456
        %v745 = vunpack.c.l.b16 %v457
        %v746 = vunpack.c.l.b16 %v458
        %v747 = vunpack.c.l.b16 %v459
        %v748 = vunpack.c.l.b16 %v460
        %v749 = vunpack.c.l.b16 %v461
        %v750 = vunpack.c.l.b16 %v462
        %v751 = vunpack.c.l.b16 %v463
        %v752 = vunpack.c.l.b16 %v464
        %v753 = vunpack.c.l.b16 %v465
        %v754 = vunpack.c.l.b16 %v466
        %v755 = vunpack.c.l.b16 %v467
        %v756 = vunpack.c.l.b16 %v468
        %v757 = vunpack.c.l.b16 %v469
        %v758 = vunpack.c.l.b16 %v470
        %v759 = vunpack.c.l.b16 %v471
        %v760 = vunpack.c.l.b16 %v472
        %v761 = vunpack.c.l.b16 %v473
        %v762 = vunpack.c.l.b16 %v474
        %v763 = vunpack.c.l.b16 %v475
        %v764 = vunpack.c.l.b16 %v476
        %v765 = vunpack.c.l.b16 %v477
        %v766 = vunpack.c.l.b16 %v478
        %v767 = vunpack.c.l.b16 %v479
        %v768 = vunpack.c.l.b16 %v480
        %v769 = vunpack.c.l.b16 %v481
        %v770 = vunpack.c.l.b16 %v482
        %v771 = vpack.c.b16 %v708, %v707
        %v772 = vpack.c.b16 %v710, %v709
        %v773 = vpack.c.b16 %v712, %v711
        %v774 = vpack.c.b16 %v714, %v713
        %v775 = vpack.c.b16 %v716, %v715
        %v776 = vpack.c.b16 %v718, %v717
        %v777 = vpack.c.b16 %v720, %v719
        %v778 = vpack.c.b16 %v722, %v721
        %v779 = vpack.c.b16 %v724, %v723
        %v780 = vpack.c.b16 %v726, %v725
        %v781 = vpack.c.b16 %v728, %v727
        %v782 = vpack.c.b16 %v730, %v729
        %v783 = vpack.c.b16 %v732, %v731
        %v784 = vpack.c.b16 %v734, %v733
        %v785 = vpack.c.b16 %v736, %v735
        %v786 = vpack.c.b16 %v738, %v737
        %v787 = vpack.c.b16 %v740, %v739
        %v788 = vpack.c.b16 %v742, %v741
        %v789 = vpack.c.b16 %v744, %v743
        %v790 = vpack.c.b16 %v746, %v745
        %v791 = vpack.c.b16 %v748, %v747
        %v792 = vpack.c.b16 %v750, %v749
        %v793 = vpack.c.b16 %v752, %v751
        %v794 = vpack.c.b16 %v754, %v753
        %v795 = vpack.c.b16 %v756, %v755
        %v796 = vpack.c.b16 %v758, %v757
        %v797 = vpack.c.b16 %v760, %v759
        %v798 = vpack.c.b16 %v762, %v761
        %v799 = vpack.c.b16 %v764, %v763
        %v800 = vpack.c.b16 %v766, %v765
        %v801 = vpack.c.b16 %v768, %v767
        %v802 = vpack.c.b16 %v770, %v769
        %835 = vmatprep.subr.bf16.mxu0 0
        %836 = vmatpush1.bf16.msra.mxu0 %v771
        %837 = vmatprep.subr.bf16.mxu0 0
        %838 = vmatpush1.bf16.msra.mxu0 %v772
        %839 = vmatprep.subr.bf16.mxu0 0
        %840 = vmatpush1.bf16.msra.mxu0 %v773
        %841 = vmatprep.subr.bf16.mxu0 0
        %842 = vmatpush1.bf16.msra.mxu0 %v774
        %843 = vmatprep.subr.bf16.mxu0 0
        %844 = vmatpush1.bf16.msra.mxu0 %v775
        %845 = vmatprep.subr.bf16.mxu0 0
        %846 = vmatpush1.bf16.msra.mxu0 %v776
        %847 = vmatprep.subr.bf16.mxu0 0
        %848 = vmatpush1.bf16.msra.mxu0 %v777
        %849 = vmatprep.subr.bf16.mxu0 0
        %850 = vmatpush1.bf16.msra.mxu0 %v778
        %851 = vmatprep.subr.bf16.mxu0 0
        %852 = vmatpush1.bf16.msra.mxu0 %v779
        %853 = vmatprep.subr.bf16.mxu0 0
        %854 = vmatpush1.bf16.msra.mxu0 %v780
        %855 = vmatprep.subr.bf16.mxu0 0
        %856 = vmatpush1.bf16.msra.mxu0 %v781
        %857 = vmatprep.subr.bf16.mxu0 0
        %858 = vmatpush1.bf16.msra.mxu0 %v782
        %859 = vmatprep.subr.bf16.mxu0 0
        %860 = vmatpush1.bf16.msra.mxu0 %v783
        %861 = vmatprep.subr.bf16.mxu0 0
        %862 = vmatpush1.bf16.msra.mxu0 %v784
        %863 = vmatprep.subr.bf16.mxu0 0
        %864 = vmatpush1.bf16.msra.mxu0 %v785
        %865 = vmatprep.subr.bf16.mxu0 0
        %866 = vmatpush1.bf16.msra.mxu0 %v786
        %867 = vmatprep.mubr.bf16.mxu0 %v580
        %868 = vmatmul.mubr.bf16.gmra.mrb[0].mxu0 %v579
        %v869 = vpop.f32.mrb[0].mxu0
        %v870 = vadd.f32 0.0, %v869
        %v871 = vpop.f32.mrb[0].mxu0
        %v872 = vpop.f32.mrb[0].mxu0
        %v873 = vadd.f32 0.0, %v872
        %v874 = vpop.f32.mrb[0].mxu0
        %875 = vmatprep.mubr.bf16.mxu0 %v584
        %876 = vmatmul.mubr.bf16.gmra.mrb[0].mxu0 %v583
        %v877 = vpop.f32.mrb[0].mxu0
        %v878 = vadd.f32 0.0, %v877
        %v879 = vpop.f32.mrb[0].mxu0
        %v880 = vpop.f32.mrb[0].mxu0
        %v881 = vadd.f32 0.0, %v880
        %v882 = vpop.f32.mrb[0].mxu0
        %883 = vmatprep.mubr.bf16.mxu0 %v588
        %884 = vmatmul.mubr.bf16.gmra.mrb[0].mxu0 %v587
        %v885 = vpop.f32.mrb[0].mxu0
        %v886 = vadd.f32 0.0, %v885
        %v887 = vpop.f32.mrb[0].mxu0
        %v888 = vpop.f32.mrb[0].mxu0
        %v889 = vadd.f32 0.0, %v888
        %v890 = vpop.f32.mrb[0].mxu0
        %891 = vmatprep.mubr.bf16.mxu0 %v592
        %892 = vmatmul.mubr.bf16.gmra.mrb[0].mxu0 %v591
        %v893 = vpop.f32.mrb[0].mxu0
        %v894 = vadd.f32 0.0, %v893
        %v895 = vpop.f32.mrb[0].mxu0
        %v896 = vpop.f32.mrb[0].mxu0
        %v897 = vadd.f32 0.0, %v896
        %v898 = vpop.f32.mrb[0].mxu0
        %899 = vmatprep.mubr.bf16.mxu0 %v596
        %900 = vmatmul.mubr.bf16.gmra.mrb[0].mxu0 %v595
        %v901 = vpop.f32.mrb[0].mxu0
        %v902 = vadd.f32 0.0, %v901
        %v903 = vpop.f32.mrb[0].mxu0
        %v904 = vpop.f32.mrb[0].mxu0
        %v905 = vadd.f32 0.0, %v904
        %v906 = vpop.f32.mrb[0].mxu0
        %907 = vmatprep.mubr.bf16.mxu0 %v600
        %908 = vmatmul.mubr.bf16.gmra.mrb[0].mxu0 %v599
        %v909 = vpop.f32.mrb[0].mxu0
        %v910 = vadd.f32 0.0, %v909
        %v911 = vpop.f32.mrb[0].mxu0
        %v912 = vpop.f32.mrb[0].mxu0
        %v913 = vadd.f32 0.0, %v912
        %v914 = vpop.f32.mrb[0].mxu0
        %915 = vmatprep.mubr.bf16.mxu0 %v604
        %916 = vmatmul.mubr.bf16.gmra.mrb[0].mxu0 %v603
        %v917 = vpop.f32.mrb[0].mxu0
        %v918 = vadd.f32 0.0, %v917
        %v919 = vpop.f32.mrb[0].mxu0
        %v920 = vpop.f32.mrb[0].mxu0
        %v921 = vadd.f32 0.0, %v920
        %v922 = vpop.f32.mrb[0].mxu0
        %923 = vmatprep.mubr.bf16.mxu0 %v608
        %924 = vmatmul.mubr.bf16.gmra.mrb[0].mxu0 %v607
        %v925 = vpop.f32.mrb[0].mxu0
        %v926 = vadd.f32 0.0, %v925
        %v927 = vpop.f32.mrb[0].mxu0
        %v928 = vpop.f32.mrb[0].mxu0
        %v929 = vadd.f32 0.0, %v928
        %v930 = vpop.f32.mrb[0].mxu0
        %931 = vdwg.mxu0
        %932 = vmatprep.subr.bf16.mxu0 0
        %933 = vmatpush1.bf16.msra.mxu0 %v787
        %934 = vmatprep.subr.bf16.mxu0 0
        %935 = vmatpush1.bf16.msra.mxu0 %v788
        %936 = vmatprep.subr.bf16.mxu0 0
        %937 = vmatpush1.bf16.msra.mxu0 %v789
        %938 = vmatprep.subr.bf16.mxu0 0
        %939 = vmatpush1.bf16.msra.mxu0 %v790
        %940 = vmatprep.subr.bf16.mxu0 0
        %941 = vmatpush1.bf16.msra.mxu0 %v791
        %942 = vmatprep.subr.bf16.mxu0 0
        %943 = vmatpush1.bf16.msra.mxu0 %v792
        %944 = vmatprep.subr.bf16.mxu0 0
        %945 = vmatpush1.bf16.msra.mxu0 %v793
        %946 = vmatprep.subr.bf16.mxu0 0
        %947 = vmatpush1.bf16.msra.mxu0 %v794
        %948 = vmatprep.subr.bf16.mxu0 0
        %949 = vmatpush1.bf16.msra.mxu0 %v795
        %950 = vmatprep.subr.bf16.mxu0 0
        %951 = vmatpush1.bf16.msra.mxu0 %v796
        %952 = vmatprep.subr.bf16.mxu0 0
        %953 = vmatpush1.bf16.msra.mxu0 %v797
        %954 = vmatprep.subr.bf16.mxu0 0
        %955 = vmatpush1.bf16.msra.mxu0 %v798
        %956 = vmatprep.subr.bf16.mxu0 0
        %957 = vmatpush1.bf16.msra.mxu0 %v799
        %958 = vmatprep.subr.bf16.mxu0 0
        %959 = vmatpush1.bf16.msra.mxu0 %v800
        %960 = vmatprep.subr.bf16.mxu0 0
        %961 = vmatpush1.bf16.msra.mxu0 %v801
        %962 = vmatprep.subr.bf16.mxu0 0
        %963 = vmatpush1.bf16.msra.mxu0 %v802
        %964 = vmatprep.mubr.bf16.mxu0 %v582
        %965 = vmatmul.mubr.bf16.gmra.mrb[0].mxu0 %v581
        %v966 = vpop.f32.mrb[0].mxu0
        %v967 = vadd.f32 %v870, %v966
        %v968 = vpop.f32.mrb[0].mxu0
        %v969 = vpop.f32.mrb[0].mxu0
        %v970 = vadd.f32 %v873, %v969
        %v971 = vpop.f32.mrb[0].mxu0
        %972 = vmatprep.mubr.bf16.mxu0 %v586
        %973 = vmatmul.mubr.bf16.gmra.mrb[0].mxu0 %v585
        %v974 = vpop.f32.mrb[0].mxu0
        %v975 = vadd.f32 %v878, %v974
        %v976 = vpop.f32.mrb[0].mxu0
        %v977 = vpop.f32.mrb[0].mxu0
        %v978 = vadd.f32 %v881, %v977
        %v979 = vpop.f32.mrb[0].mxu0
        %980 = vmatprep.mubr.bf16.mxu0 %v590
        %981 = vmatmul.mubr.bf16.gmra.mrb[0].mxu0 %v589
        %v982 = vpop.f32.mrb[0].mxu0
        %v983 = vadd.f32 %v886, %v982
        %v984 = vpop.f32.mrb[0].mxu0
        %v985 = vpop.f32.mrb[0].mxu0
        %v986 = vadd.f32 %v889, %v985
        %v987 = vpop.f32.mrb[0].mxu0
        %988 = vmatprep.mubr.bf16.mxu0 %v594
        %989 = vmatmul.mubr.bf16.gmra.mrb[0].mxu0 %v593
        %v990 = vpop.f32.mrb[0].mxu0
        %v991 = vadd.f32 %v894, %v990
        %v992 = vpop.f32.mrb[0].mxu0
        %v993 = vpop.f32.mrb[0].mxu0
        %v994 = vadd.f32 %v897, %v993
        %v995 = vpop.f32.mrb[0].mxu0
        %996 = vmatprep.mubr.bf16.mxu0 %v598
        %997 = vmatmul.mubr.bf16.gmra.mrb[0].mxu0 %v597
        %v998 = vpop.f32.mrb[0].mxu0
        %v999 = vadd.f32 %v902, %v998
        %v1000 = vpop.f32.mrb[0].mxu0
        %v1001 = vpop.f32.mrb[0].mxu0
        %v1002 = vadd.f32 %v905, %v1001
        %v1003 = vpop.f32.mrb[0].mxu0
        %1004 = vmatprep.mubr.bf16.mxu0 %v602
        %1005 = vmatmul.mubr.bf16.gmra.mrb[0].mxu0 %v601
        %v1006 = vpop.f32.mrb[0].mxu0
        %v1007 = vadd.f32 %v910, %v1006
        %v1008 = vpop.f32.mrb[0].mxu0
        %v1009 = vpop.f32.mrb[0].mxu0
        %v1010 = vadd.f32 %v913, %v1009
        %v1011 = vpop.f32.mrb[0].mxu0
        %1012 = vmatprep.mubr.bf16.mxu0 %v606
        %1013 = vmatmul.mubr.bf16.gmra.mrb[0].mxu0 %v605
        %v1014 = vpop.f32.mrb[0].mxu0
        %v1015 = vadd.f32 %v918, %v1014
        %v1016 = vpop.f32.mrb[0].mxu0
        %v1017 = vpop.f32.mrb[0].mxu0
        %v1018 = vadd.f32 %v921, %v1017
        %v1019 = vpop.f32.mrb[0].mxu0
        %1020 = vmatprep.mubr.bf16.mxu0 %v610
        %1021 = vmatmul.mubr.bf16.gmra.mrb[0].mxu0 %v609
        %v1022 = vpop.f32.mrb[0].mxu0
        %v1023 = vadd.f32 %v926, %v1022
        %v1024 = vpop.f32.mrb[0].mxu0
        %v1025 = vpop.f32.mrb[0].mxu0
        %v1026 = vadd.f32 %v929, %v1025
        %v1027 = vpop.f32.mrb[0].mxu0
        %1028 = vdwg.mxu0
        %v1029 = vadd.f32 %v371, %v967
        %v1030 = vadd.f32 %v372, %v970
        %v1031 = vadd.f32 %v373, %v975
        %v1032 = vadd.f32 %v374, %v978
        %v1033 = vadd.f32 %v375, %v983
        %v1034 = vadd.f32 %v376, %v986
        %v1035 = vadd.f32 %v377, %v991
        %v1036 = vadd.f32 %v378, %v994
        %v1037 = vadd.f32 %v379, %v999
        %v1038 = vadd.f32 %v380, %v1002
        %v1039 = vadd.f32 %v381, %v1007
        %v1040 = vadd.f32 %v382, %v1010
        %v1041 = vadd.f32 %v383, %v1015
        %v1042 = vadd.f32 %v384, %v1018
        %v1043 = vadd.f32 %v385, %v1023
        %v1044 = vadd.f32 %v386, %v1026
        %1045 = vst [vmem:[#allocation2] sm:$0xff] %v1029
        %1046 = vst [vmem:[#allocation2 + $0x8] sm:$0xff] %v1030
        %1047 = vst [vmem:[#allocation2 + $0x10] sm:$0xff] %v1031
        %1048 = vst [vmem:[#allocation2 + $0x18] sm:$0xff] %v1032
        %1049 = vst [vmem:[#allocation2 + $0x20] sm:$0xff] %v1033
        %1050 = vst [vmem:[#allocation2 + $0x28] sm:$0xff] %v1034
        %1051 = vst [vmem:[#allocation2 + $0x30] sm:$0xff] %v1035
        %1052 = vst [vmem:[#allocation2 + $0x38] sm:$0xff] %v1036
        %1053 = vst [vmem:[#allocation2 + $0x40] sm:$0xff] %v1037
        %1054 = vst [vmem:[#allocation2 + $0x48] sm:$0xff] %v1038
        %1055 = vst [vmem:[#allocation2 + $0x50] sm:$0xff] %v1039
        %1056 = vst [vmem:[#allocation2 + $0x58] sm:$0xff] %v1040
        %1057 = vst [vmem:[#allocation2 + $0x60] sm:$0xff] %v1041
        %1058 = vst [vmem:[#allocation2 + $0x68] sm:$0xff] %v1042
        %1059 = vst [vmem:[#allocation2 + $0x70] sm:$0xff] %v1043
        %1060 = vst [vmem:[#allocation2 + $0x78] sm:$0xff] %v1044
        %p1061 = scmp.eq.s32.totalorder %s22, 1
        // Predicated region
        $region68: #{biomedclip_forward.1} parent=58 // pred_check
          %p1062 = pneg %p1061
        $region69: #{biomedclip_forward.1} parent=58 // pred_check_branch
          %1064 = sbr.rel (%p1062) target = $region71
        $region70: #{biomedclip_forward.1} parent=58 // pred_region
          %v1065 = vld [vmem:[#allocation2] sm:$0xff]
          %v1066 = vld [vmem:[#allocation2 + $0x8] sm:$0xff]
          %v1067 = vld [vmem:[#allocation2 + $0x10] sm:$0xff]
          %v1068 = vld [vmem:[#allocation2 + $0x18] sm:$0xff]
          %v1069 = vld [vmem:[#allocation2 + $0x20] sm:$0xff]
          %v1070 = vld [vmem:[#allocation2 + $0x28] sm:$0xff]
          %v1071 = vld [vmem:[#allocation2 + $0x30] sm:$0xff]
          %v1072 = vld [vmem:[#allocation2 + $0x38] sm:$0xff]
          %v1073 = vld [vmem:[#allocation2 + $0x40] sm:$0xff]
          %v1074 = vld [vmem:[#allocation2 + $0x48] sm:$0xff]
          %v1075 = vld [vmem:[#allocation2 + $0x50] sm:$0xff]
          %v1076 = vld [vmem:[#allocation2 + $0x58] sm:$0xff]
          %v1077 = vld [vmem:[#allocation2 + $0x60] sm:$0xff]
          %v1078 = vld [vmem:[#allocation2 + $0x68] sm:$0xff]
          %v1079 = vld [vmem:[#allocation2 + $0x70] sm:$0xff]
          %v1080 = vld [vmem:[#allocation2 + $0x78] sm:$0xff]
          %v1081 = vmul.f32 %v1065, %v1065
          %v1082 = vmul.f32 %v1066, %v1066
          %v1083 = vmul.f32 %v1067, %v1067
          %v1084 = vmul.f32 %v1068, %v1068
          %v1085 = vmul.f32 %v1069, %v1069
          %v1086 = vmul.f32 %v1070, %v1070
          %v1087 = vmul.f32 %v1071, %v1071
          %v1088 = vmul.f32 %v1072, %v1072
          %v1089 = vmul.f32 %v1073, %v1073
          %v1090 = vmul.f32 %v1074, %v1074
          %v1091 = vmul.f32 %v1075, %v1075
          %v1092 = vmul.f32 %v1076, %v1076
          %v1093 = vmul.f32 %v1077, %v1077
          %v1094 = vmul.f32 %v1078, %v1078
          %v1095 = vmul.f32 %v1079, %v1079
          %v1096 = vmul.f32 %v1080, %v1080
          %1097 = vadd.xlane.f32.xlu0 %v1081
          %v1098 = vpop.xlane.xlu0 %1097
          %1099 = vadd.xlane.f32.xlu0 %v1082
          %v1100 = vpop.xlane.xlu0 %1099
          %1101 = vadd.xlane.f32.xlu0 %v1083
          %v1102 = vpop.xlane.xlu0 %1101
          %1103 = vadd.xlane.f32.xlu0 %v1084
          %v1104 = vpop.xlane.xlu0 %1103
          %1105 = vadd.xlane.f32.xlu0 %v1085
          %v1106 = vpop.xlane.xlu0 %1105
          %1107 = vadd.xlane.f32.xlu0 %v1086
          %v1108 = vpop.xlane.xlu0 %1107
          %1109 = vadd.xlane.f32.xlu0 %v1087
          %v1110 = vpop.xlane.xlu0 %1109
          %1111 = vadd.xlane.f32.xlu0 %v1088
          %v1112 = vpop.xlane.xlu0 %1111
          %1113 = vadd.xlane.f32.xlu0 %v1089
          %v1114 = vpop.xlane.xlu0 %1113
          %1115 = vadd.xlane.f32.xlu0 %v1090
          %v1116 = vpop.xlane.xlu0 %1115
          %1117 = vadd.xlane.f32.xlu0 %v1091
          %v1118 = vpop.xlane.xlu0 %1117
          %1119 = vadd.xlane.f32.xlu0 %v1092
          %v1120 = vpop.xlane.xlu0 %1119
          %1121 = vadd.xlane.f32.xlu0 %v1093
          %v1122 = vpop.xlane.xlu0 %1121
          %1123 = vadd.xlane.f32.xlu0 %v1094
          %v1124 = vpop.xlane.xlu0 %1123
          %1125 = vadd.xlane.f32.xlu0 %v1095
          %v1126 = vpop.xlane.xlu0 %1125
          %1127 = vadd.xlane.f32.xlu0 %v1096
          %v1128 = vpop.xlane.xlu0 %1127
          %v1129 = vadd.f32 %v1098, 1e-12
          %v1130 = vadd.f32 %v1100, 1e-12
          %v1131 = vadd.f32 %v1102, 1e-12
          %v1132 = vadd.f32 %v1104, 1e-12
          %v1133 = vadd.f32 %v1106, 1e-12
          %v1134 = vadd.f32 %v1108, 1e-12
          %v1135 = vadd.f32 %v1110, 1e-12
          %v1136 = vadd.f32 %v1112, 1e-12
          %v1137 = vadd.f32 %v1114, 1e-12
          %v1138 = vadd.f32 %v1116, 1e-12
          %v1139 = vadd.f32 %v1118, 1e-12
          %v1140 = vadd.f32 %v1120, 1e-12
          %v1141 = vadd.f32 %v1122, 1e-12
          %v1142 = vadd.f32 %v1124, 1e-12
          %v1143 = vadd.f32 %v1126, 1e-12
          %v1144 = vadd.f32 %v1128, 1e-12
          %v1145 = vrsqrt.pop %v1129
          %v1146 = vrsqrt.pop %v1130
          %v1147 = vrsqrt.pop %v1131
          %v1148 = vrsqrt.pop %v1132
          %v1149 = vrsqrt.pop %v1133
          %v1150 = vrsqrt.pop %v1134
          %v1151 = vrsqrt.pop %v1135
          %v1152 = vrsqrt.pop %v1136
          %v1153 = vrsqrt.pop %v1137
          %v1154 = vrsqrt.pop %v1138
          %v1155 = vrsqrt.pop %v1139
          %v1156 = vrsqrt.pop %v1140
          %v1157 = vrsqrt.pop %v1141
          %v1158 = vrsqrt.pop %v1142
          %v1159 = vrsqrt.pop %v1143
          %v1160 = vrsqrt.pop %v1144
          %v1161 = vmul.f32 %v1065, %v1145
          %v1162 = vmul.f32 %v1066, %v1146
          %v1163 = vmul.f32 %v1067, %v1147
          %v1164 = vmul.f32 %v1068, %v1148
          %v1165 = vmul.f32 %v1069, %v1149
          %v1166 = vmul.f32 %v1070, %v1150
          %v1167 = vmul.f32 %v1071, %v1151
          %v1168 = vmul.f32 %v1072, %v1152
          %v1169 = vmul.f32 %v1073, %v1153
          %v1170 = vmul.f32 %v1074, %v1154
          %v1171 = vmul.f32 %v1075, %v1155
          %v1172 = vmul.f32 %v1076, %v1156
          %v1173 = vmul.f32 %v1077, %v1157
          %v1174 = vmul.f32 %v1078, %v1158
          %v1175 = vmul.f32 %v1079, %v1159
          %v1176 = vmul.f32 %v1080, %v1160
          %v1177 = vld [vmem:[%s3] sm:$0xf]
          %v1178 = vld [vmem:[%s3 + $0x4] sm:$0xf]
          %v1179 = vld [vmem:[%s3 + $0x8] sm:$0xf]
          %v1180 = vld [vmem:[%s3 + $0xc] sm:$0xf]
          %v1181 = vld [vmem:[%s3 + $0x10] sm:$0xf]
          %v1182 = vld [vmem:[%s3 + $0x14] sm:$0xf]
          %v1183 = vld [vmem:[%s3 + $0x18] sm:$0xf]
          %v1184 = vld [vmem:[%s3 + $0x1c] sm:$0xf]
          %v1185 = vld [vmem:[%s3 + $0x20] sm:$0xf]
          %v1186 = vld [vmem:[%s3 + $0x24] sm:$0xf]
          %v1187 = vld [vmem:[%s3 + $0x28] sm:$0xf]
          %v1188 = vld [vmem:[%s3 + $0x2c] sm:$0xf]
          %v1189 = vld [vmem:[%s3 + $0x30] sm:$0xf]
          %v1190 = vld [vmem:[%s3 + $0x34] sm:$0xf]
          %v1191 = vld [vmem:[%s3 + $0x38] sm:$0xf]
          %v1192 = vld [vmem:[%s3 + $0x3c] sm:$0xf]
          %v1193 = vld [vmem:[%s4] sm:$0xf]
          %v1194 = vld [vmem:[%s4 + $0x4] sm:$0xf]
          %v1195 = vld [vmem:[%s4 + $0x8] sm:$0xf]
          %v1196 = vld [vmem:[%s4 + $0xc] sm:$0xf]
          %v1197 = vld [vmem:[%s4 + $0x10] sm:$0xf]
          %v1198 = vld [vmem:[%s4 + $0x14] sm:$0xf]
          %v1199 = vld [vmem:[%s4 + $0x18] sm:$0xf]
          %v1200 = vld [vmem:[%s4 + $0x1c] sm:$0xf]
          %v1201 = vld [vmem:[%s4 + $0x20] sm:$0xf]
          %v1202 = vld [vmem:[%s4 + $0x24] sm:$0xf]
          %v1203 = vld [vmem:[%s4 + $0x28] sm:$0xf]
          %v1204 = vld [vmem:[%s4 + $0x2c] sm:$0xf]
          %v1205 = vld [vmem:[%s4 + $0x30] sm:$0xf]
          %v1206 = vld [vmem:[%s4 + $0x34] sm:$0xf]
          %v1207 = vld [vmem:[%s4 + $0x38] sm:$0xf]
          %v1208 = vld [vmem:[%s4 + $0x3c] sm:$0xf]
          %v1225 = vunpack.c.l.b16 %v1177
          %v1226 = vunpack.c.l.b16 %v1178
          %v1227 = vunpack.c.l.b16 %v1179
          %v1228 = vunpack.c.l.b16 %v1180
          %v1229 = vunpack.c.l.b16 %v1181
          %v1230 = vunpack.c.l.b16 %v1182
          %v1231 = vunpack.c.l.b16 %v1183
          %v1232 = vunpack.c.l.b16 %v1184
          %v1233 = vunpack.c.l.b16 %v1185
          %v1234 = vunpack.c.l.b16 %v1186
          %v1235 = vunpack.c.l.b16 %v1187
          %v1236 = vunpack.c.l.b16 %v1188
          %v1237 = vunpack.c.l.b16 %v1189
          %v1238 = vunpack.c.l.b16 %v1190
          %v1239 = vunpack.c.l.b16 %v1191
          %v1240 = vunpack.c.l.b16 %v1192
          %v1241 = vpack.c.b16 %v1226, %v1225
          %v1242 = vpack.c.b16 %v1228, %v1227
          %v1243 = vpack.c.b16 %v1230, %v1229
          %v1244 = vpack.c.b16 %v1232, %v1231
          %v1245 = vpack.c.b16 %v1234, %v1233
          %v1246 = vpack.c.b16 %v1236, %v1235
          %v1247 = vpack.c.b16 %v1238, %v1237
          %v1248 = vpack.c.b16 %v1240, %v1239
          %v1273 = vunpack.c.l.b16 %v1193
          %v1274 = vunpack.c.l.b16 %v1194
          %v1275 = vunpack.c.l.b16 %v1195
          %v1276 = vunpack.c.l.b16 %v1196
          %v1277 = vunpack.c.l.b16 %v1197
          %v1278 = vunpack.c.l.b16 %v1198
          %v1279 = vunpack.c.l.b16 %v1199
          %v1280 = vunpack.c.l.b16 %v1200
          %v1281 = vunpack.c.l.b16 %v1201
          %v1282 = vunpack.c.l.b16 %v1202
          %v1283 = vunpack.c.l.b16 %v1203
          %v1284 = vunpack.c.l.b16 %v1204
          %v1285 = vunpack.c.l.b16 %v1205
          %v1286 = vunpack.c.l.b16 %v1206
          %v1287 = vunpack.c.l.b16 %v1207
          %v1288 = vunpack.c.l.b16 %v1208
          %v1289 = vpack.c.b16 %v1274, %v1273
          %v1290 = vpack.c.b16 %v1276, %v1275
          %v1291 = vpack.c.b16 %v1278, %v1277
          %v1292 = vpack.c.b16 %v1280, %v1279
          %v1293 = vpack.c.b16 %v1282, %v1281
          %v1294 = vpack.c.b16 %v1284, %v1283
          %v1295 = vpack.c.b16 %v1286, %v1285
          %v1296 = vpack.c.b16 %v1288, %v1287
          %1305 = vmatprep.subr.bf16.mxu0 0
          %1306 = vmatpush1.bf16.msra.mxu0 %v1289
          %1307 = vmatprep.subr.bf16.mxu0 0
          %1308 = vmatpush1.bf16.msra.mxu0 %v1290
          %1309 = vmatprep.subr.bf16.mxu0 0
          %1310 = vmatpush1.bf16.msra.mxu0 %v1291
          %1311 = vmatprep.subr.bf16.mxu0 0
          %1312 = vmatpush1.bf16.msra.mxu0 %v1292
          %1313 = vmatprep.subr.bf16.mxu0 0
          %1314 = vmatpush1.bf16.msra.mxu0 %v1293
          %1315 = vmatprep.subr.bf16.mxu0 0
          %1316 = vmatpush1.bf16.msra.mxu0 %v1294
          %1317 = vmatprep.subr.bf16.mxu0 0
          %1318 = vmatpush1.bf16.msra.mxu0 %v1295
          %1319 = vmatprep.subr.bf16.mxu0 0
          %1320 = vmatpush1.bf16.msra.mxu0 %v1296
          %1321 = vmatprep.subr.bf16.mxu0 0
          %1322 = vmatpush1.bf16.msra.mxu0 0
          %1323 = vmatprep.subr.bf16.mxu0 0
          %1324 = vmatpush1.bf16.msra.mxu0 0
          %1325 = vmatprep.subr.bf16.mxu0 0
          %1326 = vmatpush1.bf16.msra.mxu0 0
          %1327 = vmatprep.subr.bf16.mxu0 0
          %1328 = vmatpush1.bf16.msra.mxu0 0
          %1329 = vmatprep.subr.bf16.mxu0 0
          %1330 = vmatpush1.bf16.msra.mxu0 0
          %1331 = vmatprep.subr.bf16.mxu0 0
          %1332 = vmatpush1.bf16.msra.mxu0 0
          %1333 = vmatprep.subr.bf16.mxu0 0
          %1334 = vmatpush1.bf16.msra.mxu0 0
          %1335 = vmatprep.subr.bf16.mxu0 0
          %1336 = vmatpush1.bf16.msra.mxu0 0
          %1337 = vmatprep.mubr.bf16.mxu0 0
          %1338 = vmatmul.mubr.bf16.gmra.mrb[0].mxu0 %v1241
          %v1339 = vpop.f32.mrb[0].mxu0
          %v1340 = vadd.f32 0.0, %v1339
          %v1341 = vpop.f32.mrb[0].mxu0
          %v1342 = vpop.f32.mrb[0].mxu0
          %v1343 = vadd.f32 0.0, %v1342
          %v1344 = vpop.f32.mrb[0].mxu0
          %1345 = vmatprep.mubr.bf16.mxu0 0
          %1346 = vmatmul.mubr.bf16.gmra.mrb[0].mxu0 %v1242
          %v1347 = vpop.f32.mrb[0].mxu0
          %v1348 = vadd.f32 0.0, %v1347
          %v1349 = vpop.f32.mrb[0].mxu0
          %v1350 = vpop.f32.mrb[0].mxu0
          %v1351 = vadd.f32 0.0, %v1350
          %v1352 = vpop.f32.mrb[0].mxu0
          %1353 = vmatprep.mubr.bf16.mxu0 0
          %1354 = vmatmul.mubr.bf16.gmra.mrb[0].mxu0 %v1243
          %v1355 = vpop.f32.mrb[0].mxu0
          %v1356 = vadd.f32 0.0, %v1355
          %v1357 = vpop.f32.mrb[0].mxu0
          %v1358 = vpop.f32.mrb[0].mxu0
          %v1359 = vadd.f32 0.0, %v1358
          %v1360 = vpop.f32.mrb[0].mxu0
          %1361 = vmatprep.mubr.bf16.mxu0 0
          %1362 = vmatmul.mubr.bf16.gmra.mrb[0].mxu0 %v1244
          %v1363 = vpop.f32.mrb[0].mxu0
          %v1364 = vadd.f32 0.0, %v1363
          %v1365 = vpop.f32.mrb[0].mxu0
          %v1366 = vpop.f32.mrb[0].mxu0
          %v1367 = vadd.f32 0.0, %v1366
          %v1368 = vpop.f32.mrb[0].mxu0
          %1369 = vmatprep.mubr.bf16.mxu0 0
          %1370 = vmatmul.mubr.bf16.gmra.mrb[0].mxu0 %v1245
          %v1371 = vpop.f32.mrb[0].mxu0
          %v1372 = vadd.f32 0.0, %v1371
          %v1373 = vpop.f32.mrb[0].mxu0
          %v1374 = vpop.f32.mrb[0].mxu0
          %v1375 = vadd.f32 0.0, %v1374
          %v1376 = vpop.f32.mrb[0].mxu0
          %1377 = vmatprep.mubr.bf16.mxu0 0
          %1378 = vmatmul.mubr.bf16.gmra.mrb[0].mxu0 %v1246
          %v1379 = vpop.f32.mrb[0].mxu0
          %v1380 = vadd.f32 0.0, %v1379
          %v1381 = vpop.f32.mrb[0].mxu0
          %v1382 = vpop.f32.mrb[0].mxu0
          %v1383 = vadd.f32 0.0, %v1382
          %v1384 = vpop.f32.mrb[0].mxu0
          %1385 = vmatprep.mubr.bf16.mxu0 0
          %1386 = vmatmul.mubr.bf16.gmra.mrb[0].mxu0 %v1247
          %v1387 = vpop.f32.mrb[0].mxu0
          %v1388 = vadd.f32 0.0, %v1387
          %v1389 = vpop.f32.mrb[0].mxu0
          %v1390 = vpop.f32.mrb[0].mxu0
          %v1391 = vadd.f32 0.0, %v1390
          %v1392 = vpop.f32.mrb[0].mxu0
          %1393 = vmatprep.mubr.bf16.mxu0 0
          %1394 = vmatmul.mubr.bf16.gmra.mrb[0].mxu0 %v1248
          %v1395 = vpop.f32.mrb[0].mxu0
          %v1396 = vadd.f32 0.0, %v1395
          %v1397 = vpop.f32.mrb[0].mxu0
          %v1398 = vpop.f32.mrb[0].mxu0
          %v1399 = vadd.f32 0.0, %v1398
          %v1400 = vpop.f32.mrb[0].mxu0
          %1401 = vdwg.mxu0
          %s1402 = sld [smem:[#allocation3]]
          %v1403 = vmul.f32 %v1340, %v1340
          %v1404 = vmul.f32 %v1343, %v1343
          %v1405 = vmul.f32 %v1348, %v1348
          %v1406 = vmul.f32 %v1351, %v1351
          %v1407 = vmul.f32 %v1356, %v1356
          %v1408 = vmul.f32 %v1359, %v1359
          %v1409 = vmul.f32 %v1364, %v1364
          %v1410 = vmul.f32 %v1367, %v1367
          %v1411 = vmul.f32 %v1372, %v1372
          %v1412 = vmul.f32 %v1375, %v1375
          %v1413 = vmul.f32 %v1380, %v1380
          %v1414 = vmul.f32 %v1383, %v1383
          %v1415 = vmul.f32 %v1388, %v1388
          %v1416 = vmul.f32 %v1391, %v1391
          %v1417 = vmul.f32 %v1396, %v1396
          %v1418 = vmul.f32 %v1399, %v1399
          %1419 = vadd.xlane.f32.xlu0 %v1403
          %v1420 = vpop.xlane.xlu0 %1419
          %1421 = vadd.xlane.f32.xlu0 %v1404
          %v1422 = vpop.xlane.xlu0 %1421
          %1423 = vadd.xlane.f32.xlu0 %v1405
          %v1424 = vpop.xlane.xlu0 %1423
          %1425 = vadd.xlane.f32.xlu0 %v1406
          %v1426 = vpop.xlane.xlu0 %1425
          %1427 = vadd.xlane.f32.xlu0 %v1407
          %v1428 = vpop.xlane.xlu0 %1427
          %1429 = vadd.xlane.f32.xlu0 %v1408
          %v1430 = vpop.xlane.xlu0 %1429
          %1431 = vadd.xlane.f32.xlu0 %v1409
          %v1432 = vpop.xlane.xlu0 %1431
          %1433 = vadd.xlane.f32.xlu0 %v1410
          %v1434 = vpop.xlane.xlu0 %1433
          %1435 = vadd.xlane.f32.xlu0 %v1411
          %v1436 = vpop.xlane.xlu0 %1435
          %1437 = vadd.xlane.f32.xlu0 %v1412
          %v1438 = vpop.xlane.xlu0 %1437
          %1439 = vadd.xlane.f32.xlu0 %v1413
          %v1440 = vpop.xlane.xlu0 %1439
          %1441 = vadd.xlane.f32.xlu0 %v1414
          %v1442 = vpop.xlane.xlu0 %1441
          %1443 = vadd.xlane.f32.xlu0 %v1415
          %v1444 = vpop.xlane.xlu0 %1443
          %1445 = vadd.xlane.f32.xlu0 %v1416
          %v1446 = vpop.xlane.xlu0 %1445
          %1447 = vadd.xlane.f32.xlu0 %v1417
          %v1448 = vpop.xlane.xlu0 %1447
          %1449 = vadd.xlane.f32.xlu0 %v1418
          %v1450 = vpop.xlane.xlu0 %1449
          %v1451 = vadd.f32 %v1420, 1e-12
          %v1452 = vadd.f32 %v1422, 1e-12
          %v1453 = vadd.f32 %v1424, 1e-12
          %v1454 = vadd.f32 %v1426, 1e-12
          %v1455 = vadd.f32 %v1428, 1e-12
          %v1456 = vadd.f32 %v1430, 1e-12
          %v1457 = vadd.f32 %v1432, 1e-12
          %v1458 = vadd.f32 %v1434, 1e-12
          %v1459 = vadd.f32 %v1436, 1e-12
          %v1460 = vadd.f32 %v1438, 1e-12
          %v1461 = vadd.f32 %v1440, 1e-12
          %v1462 = vadd.f32 %v1442, 1e-12
          %v1463 = vadd.f32 %v1444, 1e-12
          %v1464 = vadd.f32 %v1446, 1e-12
          %v1465 = vadd.f32 %v1448, 1e-12
          %v1466 = vadd.f32 %v1450, 1e-12
          %v1467 = vrsqrt.pop %v1451
          %v1468 = vrsqrt.pop %v1452
          %v1469 = vrsqrt.pop %v1453
          %v1470 = vrsqrt.pop %v1454
          %v1471 = vrsqrt.pop %v1455
          %v1472 = vrsqrt.pop %v1456
          %v1473 = vrsqrt.pop %v1457
          %v1474 = vrsqrt.pop %v1458
          %v1475 = vrsqrt.pop %v1459
          %v1476 = vrsqrt.pop %v1460
          %v1477 = vrsqrt.pop %v1461
          %v1478 = vrsqrt.pop %v1462
          %v1479 = vrsqrt.pop %v1463
          %v1480 = vrsqrt.pop %v1464
          %v1481 = vrsqrt.pop %v1465
          %v1482 = vrsqrt.pop %v1466
          %v1483 = vstv %s1402
          %v1484 = vmul.f32 %v1483, %v1467
          %v1485 = vmul.f32 %v1483, %v1468
          %v1486 = vmul.f32 %v1483, %v1469
          %v1487 = vmul.f32 %v1483, %v1470
          %v1488 = vmul.f32 %v1483, %v1471
          %v1489 = vmul.f32 %v1483, %v1472
          %v1490 = vmul.f32 %v1483, %v1473
          %v1491 = vmul.f32 %v1483, %v1474
          %v1492 = vmul.f32 %v1483, %v1475
          %v1493 = vmul.f32 %v1483, %v1476
          %v1494 = vmul.f32 %v1483, %v1477
          %v1495 = vmul.f32 %v1483, %v1478
          %v1496 = vmul.f32 %v1483, %v1479
          %v1497 = vmul.f32 %v1483, %v1480
          %v1498 = vmul.f32 %v1483, %v1481
          %v1499 = vmul.f32 %v1483, %v1482
          %v1500 = vmul.f32 %v1340, %v1484
          %v1501 = vmul.f32 %v1343, %v1485
          %v1502 = vmul.f32 %v1348, %v1486
          %v1503 = vmul.f32 %v1351, %v1487
          %v1504 = vmul.f32 %v1356, %v1488
          %v1505 = vmul.f32 %v1359, %v1489
          %v1506 = vmul.f32 %v1364, %v1490
          %v1507 = vmul.f32 %v1367, %v1491
          %v1508 = vmul.f32 %v1372, %v1492
          %v1509 = vmul.f32 %v1375, %v1493
          %v1510 = vmul.f32 %v1380, %v1494
          %v1511 = vmul.f32 %v1383, %v1495
          %v1512 = vmul.f32 %v1388, %v1496
          %v1513 = vmul.f32 %v1391, %v1497
          %v1514 = vmul.f32 %v1396, %v1498
          %v1515 = vmul.f32 %v1399, %v1499
          %v1516 = vpack.c.bf16 %v1162, %v1161
          %v1517 = vpack.c.bf16 %v1164, %v1163
          %v1518 = vpack.c.bf16 %v1166, %v1165
          %v1519 = vpack.c.bf16 %v1168, %v1167
          %v1520 = vpack.c.bf16 %v1170, %v1169
          %v1521 = vpack.c.bf16 %v1172, %v1171
          %v1522 = vpack.c.bf16 %v1174, %v1173
          %v1523 = vpack.c.bf16 %v1176, %v1175
          %v1524 = vpack.c.bf16 %v1501, %v1500
          %v1525 = vpack.c.bf16 %v1503, %v1502
          %v1526 = vpack.c.bf16 %v1505, %v1504
          %v1527 = vpack.c.bf16 %v1507, %v1506
          %v1528 = vpack.c.bf16 %v1509, %v1508
          %v1529 = vpack.c.bf16 %v1511, %v1510
          %v1530 = vpack.c.bf16 %v1513, %v1512
          %v1531 = vpack.c.bf16 %v1515, %v1514
          %1532 = vmatprep.subr.bf16.mxu0 0
          %1533 = vmatpush1.bf16.xpose.msra.mxu0 %v1524
          %1534 = vmatprep.subr.bf16.mxu0 0
          %1535 = vmatpush1.bf16.xpose.msra.mxu0 %v1525
          %1536 = vmatprep.subr.bf16.mxu0 0
          %1537 = vmatpush1.bf16.xpose.msra.mxu0 %v1526
          %1538 = vmatprep.subr.bf16.mxu0 0
          %1539 = vmatpush1.bf16.xpose.msra.mxu0 %v1527
          %1540 = vmatprep.subr.bf16.mxu0 0
          %1541 = vmatpush1.bf16.xpose.msra.mxu0 %v1528
          %1542 = vmatprep.subr.bf16.mxu0 0
          %1543 = vmatpush1.bf16.xpose.msra.mxu0 %v1529
          %1544 = vmatprep.subr.bf16.mxu0 0
          %1545 = vmatpush1.bf16.xpose.msra.mxu0 %v1530
          %1546 = vmatprep.subr.bf16.mxu0 0
          %1547 = vmatpush1.bf16.xpose.msra.mxu0 %v1531
          %1548 = vmatprep.subr.bf16.mxu0 0
          %1549 = vmatpush1.bf16.xpose.msra.mxu0 0
          %1550 = vmatprep.subr.bf16.mxu0 0
          %1551 = vmatpush1.bf16.xpose.msra.mxu0 0
          %1552 = vmatprep.subr.bf16.mxu0 0
          %1553 = vmatpush1.bf16.xpose.msra.mxu0 0
          %1554 = vmatprep.subr.bf16.mxu0 0
          %1555 = vmatpush1.bf16.xpose.msra.mxu0 0
          %1556 = vmatprep.subr.bf16.mxu0 0
          %1557 = vmatpush1.bf16.xpose.msra.mxu0 0
          %1558 = vmatprep.subr.bf16.mxu0 0
          %1559 = vmatpush1.bf16.xpose.msra.mxu0 0
          %1560 = vmatprep.subr.bf16.mxu0 0
          %1561 = vmatpush1.bf16.xpose.msra.mxu0 0
          %1562 = vmatprep.subr.bf16.mxu0 0
          %1563 = vmatpush1.bf16.xpose.msra.mxu0 0
          %1564 = vmatprep.mubr.bf16.mxu0 0
          %1565 = vmatmul.mubr.bf16.gmra.mrb[0].mxu0 %v1516
          %v1566 = vpop.f32.mrb[0].mxu0
          %v1567 = vadd.f32 0.0, %v1566
          %v1568 = vpop.f32.mrb[0].mxu0
          %v1569 = vpop.f32.mrb[0].mxu0
          %v1570 = vadd.f32 0.0, %v1569
          %v1571 = vpop.f32.mrb[0].mxu0
          %1572 = vmatprep.mubr.bf16.mxu0 0
          %1573 = vmatmul.mubr.bf16.gmra.mrb[0].mxu0 %v1517
          %v1574 = vpop.f32.mrb[0].mxu0
          %v1575 = vadd.f32 0.0, %v1574
          %v1576 = vpop.f32.mrb[0].mxu0
          %v1577 = vpop.f32.mrb[0].mxu0
          %v1578 = vadd.f32 0.0, %v1577
          %v1579 = vpop.f32.mrb[0].mxu0
          %1580 = vmatprep.mubr.bf16.mxu0 0
          %1581 = vmatmul.mubr.bf16.gmra.mrb[0].mxu0 %v1518
          %v1582 = vpop.f32.mrb[0].mxu0
          %v1583 = vadd.f32 0.0, %v1582
          %v1584 = vpop.f32.mrb[0].mxu0
          %v1585 = vpop.f32.mrb[0].mxu0
          %v1586 = vadd.f32 0.0, %v1585
          %v1587 = vpop.f32.mrb[0].mxu0
          %1588 = vmatprep.mubr.bf16.mxu0 0
          %1589 = vmatmul.mubr.bf16.gmra.mrb[0].mxu0 %v1519
          %v1590 = vpop.f32.mrb[0].mxu0
          %v1591 = vadd.f32 0.0, %v1590
          %v1592 = vpop.f32.mrb[0].mxu0
          %v1593 = vpop.f32.mrb[0].mxu0
          %v1594 = vadd.f32 0.0, %v1593
          %v1595 = vpop.f32.mrb[0].mxu0
          %1596 = vmatprep.mubr.bf16.mxu0 0
          %1597 = vmatmul.mubr.bf16.gmra.mrb[0].mxu0 %v1520
          %v1598 = vpop.f32.mrb[0].mxu0
          %v1599 = vadd.f32 0.0, %v1598
          %v1600 = vpop.f32.mrb[0].mxu0
          %v1601 = vpop.f32.mrb[0].mxu0
          %v1602 = vadd.f32 0.0, %v1601
          %v1603 = vpop.f32.mrb[0].mxu0
          %1604 = vmatprep.mubr.bf16.mxu0 0
          %1605 = vmatmul.mubr.bf16.gmra.mrb[0].mxu0 %v1521
          %v1606 = vpop.f32.mrb[0].mxu0
          %v1607 = vadd.f32 0.0, %v1606
          %v1608 = vpop.f32.mrb[0].mxu0
          %v1609 = vpop.f32.mrb[0].mxu0
          %v1610 = vadd.f32 0.0, %v1609
          %v1611 = vpop.f32.mrb[0].mxu0
          %1612 = vmatprep.mubr.bf16.mxu0 0
          %1613 = vmatmul.mubr.bf16.gmra.mrb[0].mxu0 %v1522
          %v1614 = vpop.f32.mrb[0].mxu0
          %v1615 = vadd.f32 0.0, %v1614
          %v1616 = vpop.f32.mrb[0].mxu0
          %v1617 = vpop.f32.mrb[0].mxu0
          %v1618 = vadd.f32 0.0, %v1617
          %v1619 = vpop.f32.mrb[0].mxu0
          %1620 = vmatprep.mubr.bf16.mxu0 0
          %1621 = vmatmul.mubr.bf16.gmra.mrb[0].mxu0 %v1523
          %v1622 = vpop.f32.mrb[0].mxu0
          %v1623 = vadd.f32 0.0, %v1622
          %v1624 = vpop.f32.mrb[0].mxu0
          %v1625 = vpop.f32.mrb[0].mxu0
          %v1626 = vadd.f32 0.0, %v1625
          %v1627 = vpop.f32.mrb[0].mxu0
          %1628 = vdwg.mxu0
          %1629 = vst [vmem:[%s348] sm:$0xff] %v1567
          %1630 = vst [vmem:[%s348 + $0x8] sm:$0xff] %v1570
          %1631 = vst [vmem:[%s348 + $0x10] sm:$0xff] %v1575
          %1632 = vst [vmem:[%s348 + $0x18] sm:$0xff] %v1578
          %1633 = vst [vmem:[%s348 + $0x20] sm:$0xff] %v1583
          %1634 = vst [vmem:[%s348 + $0x28] sm:$0xff] %v1586
          %1635 = vst [vmem:[%s348 + $0x30] sm:$0xff] %v1591
          %1636 = vst [vmem:[%s348 + $0x38] sm:$0xff] %v1594
          %1637 = vst [vmem:[%s348 + $0x40] sm:$0xff] %v1599
          %1638 = vst [vmem:[%s348 + $0x48] sm:$0xff] %v1602
          %1639 = vst [vmem:[%s348 + $0x50] sm:$0xff] %v1607
          %1640 = vst [vmem:[%s348 + $0x58] sm:$0xff] %v1610
          %1641 = vst [vmem:[%s348 + $0x60] sm:$0xff] %v1615
          %1642 = vst [vmem:[%s348 + $0x68] sm:$0xff] %v1618
          %1643 = vst [vmem:[%s348 + $0x70] sm:$0xff] %v1623
          %1644 = vst [vmem:[%s348 + $0x78] sm:$0xff] %v1626
        $region71: #{biomedclip_forward.1} parent=58 // pred_fallthru
          _
        %s1645 = smul.u32 16, %s21
        %p1646 = scmp.lt.s32.totalorder %s1645, 15
        %s1647 = scalar_select %p1646, %s1645, 15
        %s1648 = smul.addr %s1647, 8
        %s1649 = scalar_lea.vmem %s5, %s1648
        // Predicated region
        $region72: #{biomedclip_forward.1} parent=58 // pred_check
          %p1650 = pneg %p164
        $region73: #{biomedclip_forward.1} parent=58 // pred_check_branch
          %1652 = sbr.rel (%p1650) target = $region75
        $region74: #{biomedclip_forward.1} parent=58 // pred_region
          %s1653 = smul.u32 16, %s21
        $region75: #{biomedclip_forward.1} parent=58 // pred_fallthru
          _
        // Predicated region
        $region76: #{biomedclip_forward.1} parent=58 // pred_check
          %p1654 = pneg %p164
        $region77: #{biomedclip_forward.1} parent=58 // pred_check_branch
          %1656 = sbr.rel (%p1654) target = $region79
        $region78: #{biomedclip_forward.1} parent=58 // pred_region
          %s1657 = smul.u32 16, %s21
          %p1658 = scmp.lt.s32.totalorder %s1657, 15
          %s1659 = scalar_select %p1658, %s1657, 15
          %s1660 = smul.addr %s1659, 8
          %s1661 = scalar_lea.vmem %s5, %s1660
        $region79: #{biomedclip_forward.1} parent=58 // pred_fallthru
          _
      $region59: #{biomedclip_forward.1} parent=5 // pred_fallthru
        _
      %p1662 = scmp.le.s32.totalorder 2, %s12
      // Predicated region
      $region80: #{biomedclip_forward.1} parent=5 // pred_check
        %p1663 = pneg %p1662
      $region81: #{biomedclip_forward.1} parent=5 // pred_check_branch
        %1665 = sbr.rel (%p1663) target = $region83
      $region82: #{biomedclip_forward.1} parent=5 // pred_region
        %s1666 = ssub.s32 %s12, 2
      $region83: #{biomedclip_forward.1} parent=5 // pred_fallthru
        _
    $region6: #{biomedclip_forward.1} parent=1 // loop_footer
      %s16 = sadd.s32 1, %s12
    $region7: #{biomedclip_forward.1} parent=1 // loop_footer_branch
      %11 = sbr.rel target = $region3
    $region8: #{biomedclip_forward.1} parent=1 // loop_exit
      _

</llo_original>
